<compile_context>
chip_gen: v5e
topology: v5e:2x2
jax: 0.10.0
libtpu: 0.0.40
codegen_flags: <defaults>
</compile_context>

<pallas_src>
import functools
import math

import jax
import jax.numpy as jnp
from jax.experimental import pallas as pl
from jax.experimental.pallas import tpu as pltpu


def _round_up(n, m):
    return ((n + m - 1) // m) * m


# ----------------------------------------------------------------------------
# Kernel
# ----------------------------------------------------------------------------
def mmfall_kernel(
    data_ref,    # (2*SP, Dw): rows 0:SP = time-major x, rows SP:2SP = epsilon
    w64_ref,     # narrow packed weight/bias slab
    w128_ref,    # wide packed weight/bias slab (fused heads)
    out_ref,     # (S, OUT_PAD) fused [p_xz_mean | p_xz_logvar], lane-padded
    zml_ref,     # (SP, 2H) fused [z_mean | z_logvar]
    *, B, B_pad, T, H, Hr, PC, lay64, lay128,
):
    f32 = jnp.float32
    S = T * B
    SP = T * B_pad

    def rd64(name):
        r0, nr, nc = lay64[name]
        v = w64_ref[r0:r0 + nr, :]
        return v if nc == v.shape[1] else v[:, :nc]

    def rd128(name):
        r0, nr, nc = lay128[name]
        v = w128_ref[r0:r0 + nr, :]
        return v if nc == v.shape[1] else v[:, :nc]

    x = data_ref[0:SP, :]                 # (SP, Dw)
    eps = data_ref[SP:2 * SP, :]          # (SP, Dw)
    if PC < x.shape[1]:
        x = x[:, :PC]
    if H < eps.shape[1]:
        eps = eps[:, :H]

    # ---------------- encoder MLP + fused [z_mean | z_logvar] head ----------
    h = jnp.tanh(
        jnp.dot(x, rd64("w_lin"), preferred_element_type=f32) + rd64("b_lin")
    )                                                            # (SP, H)
    zml = jnp.dot(h, rd128("w_ml"), preferred_element_type=f32) + rd128("b_ml")
    zml_ref[...] = zml                                           # lane-dense store

    # reparameterization trick
    z = zml[:, :H] + jnp.exp(0.5 * zml[:, H:]) * eps             # (SP, H)

    # ---------------- encoder RNN (tanh); input projection hoisted ----------
    z_proj = (
        jnp.dot(z, rd64("w_ih_e"), preferred_element_type=f32) + rd64("b_e")
    )                                                            # (SP, Hr)
    w_hh_e = rd64("w_hh_e")
    h_rnn = jnp.zeros((B_pad, Hr), f32)
    for t in range(T):                     # static unroll; 8-sublane slabs
        h_rnn = jnp.tanh(
            z_proj[t * B_pad:(t + 1) * B_pad, :]
            + jnp.dot(h_rnn, w_hh_e, preferred_element_type=f32)
        )
    # h_rnn rows 0:B are the real last hidden states.

    # ------- decoder RNN over torch's `.repeat` sequence, head fused --------
    # torch: x[:, -1, :].repeat((1, T, 1)) -> batch=1, seq=T*B, step-s input
    # is h_last[s % B].  torch.flip realized via the store index S-1-s.
    inp_proj = (
        jnp.dot(h_rnn, rd64("w_ih_d"), preferred_element_type=f32) + rd64("b_d")
    )                                                            # (B_pad, Hr)
    w_hh_d = rd64("w_hh_d")
    w_xl, b_xl = rd64("w_xl"), rd64("b_xl")
    w_head, b_head = rd128("w_head"), rd128("b_head")

    h_dec = jnp.zeros((1, Hr), f32)
    for s in range(S):                     # static unroll
        b_idx = s % B
        h_dec = jnp.tanh(
            inp_proj[b_idx:b_idx + 1, :]
            + jnp.dot(h_dec, w_hh_d, preferred_element_type=f32)
        )
        lat = jnp.tanh(
            jnp.dot(h_dec, w_xl, preferred_element_type=f32) + b_xl
        )                                                        # (1, H)
        row = jnp.dot(lat, w_head, preferred_element_type=f32) + b_head
        out_ref[S - 1 - s:S - s, :] = row                        # (1, OUT_PAD)


# ----------------------------------------------------------------------------
# Parameter init (torch-style) and one-time packing
# ----------------------------------------------------------------------------
def _init_linear(key, fan_in, fan_out):
    k1, k2 = jax.random.split(key)
    bound = 1.0 / math.sqrt(fan_in)
    w = jax.random.uniform(k1, (fan_in, fan_out), jnp.float32, -bound, bound)
    b = jax.random.uniform(k2, (1, fan_out), jnp.float32, -bound, bound)
    return w, b


def init_mmfall_params(key, num_points, channels, lin_hidden, rnn_hidden):
    keys = jax.random.split(key, 10)
    w_lin, b_lin = _init_linear(keys[0], num_points * channels, lin_hidden)
    w_mu, b_mu = _init_linear(keys[1], lin_hidden, lin_hidden)
    w_lv, b_lv = _init_linear(keys[2], lin_hidden, lin_hidden)
    # encoder RNN (torch keeps separate b_ih / b_hh; fold them together)
    w_ih_e, b_ih_e = _init_linear(keys[3], lin_hidden, rnn_hidden)
    w_hh_e, b_hh_e = _init_linear(keys[4], rnn_hidden, rnn_hidden)
    b_e = b_ih_e + b_hh_e
    # decoder RNN
    w_ih_d, b_ih_d = _init_linear(keys[5], rnn_hidden, rnn_hidden)
    w_hh_d, b_hh_d = _init_linear(keys[6], rnn_hidden, rnn_hidden)
    b_d = b_ih_d + b_hh_d
    w_xl, b_xl = _init_linear(keys[7], rnn_hidden, lin_hidden)
    w_pm, b_pm = _init_linear(keys[8], lin_hidden, channels)
    w_pv, b_pv = _init_linear(keys[9], lin_hidden, channels)
    return (
        w_lin, b_lin, w_mu, b_mu, w_lv, b_lv,
        w_ih_e, w_hh_e, b_e,
        w_ih_d, w_hh_d, b_d,
        w_xl, b_xl, w_pm, b_pm, w_pv, b_pv,
    )


def _pack(entries):
    """Stack (name, array) pairs into one slab; every block starts on an
    8-sublane-aligned row.  Returns (slab, {name: (row0, rows, cols)})."""
    width = max(a.shape[1] for _, a in entries)
    rows, layout, blocks = 0, {}, []
    for name, a in entries:
        nr, nc = a.shape
        nr_pad = _round_up(nr, 8)
        blocks.append(
            jnp.pad(a.astype(jnp.float32), ((0, nr_pad - nr), (0, width - nc)))
        )
        layout[name] = (rows, nr, nc)
        rows += nr_pad
    return jnp.concatenate(blocks, axis=0), layout


def prepare_packed_params(params, *, channels, lin_hidden, rnn_hidden):
    """One-time fusion + packing (hoisted out of the per-call forward path)."""
    (w_lin, b_lin, w_mu, b_mu, w_lv, b_lv,
     w_ih_e, w_hh_e, b_e,
     w_ih_d, w_hh_d, b_d,
     w_xl, b_xl, w_pm, b_pm, w_pv, b_pv) = params
    C = channels

    # fused mu/logvar head -> one matmul, lane-dense zml output store
    w_ml = jnp.concatenate([w_mu, w_lv], axis=1)                 # (H, 2H)
    b_ml = jnp.concatenate([b_mu, b_lv], axis=1)                 # (1, 2H)

    # fused pm/pv head, zero-padded to 128 lanes -> lane-dense output store
    out_pad = _round_up(2 * C, 128)
    w_head = jnp.pad(jnp.concatenate([w_pm, w_pv], axis=1),
                     ((0, 0), (0, out_pad - 2 * C)))             # (H, out_pad)
    b_head = jnp.pad(jnp.concatenate([b_pm, b_pv], axis=1),
                     ((0, 0), (0, out_pad - 2 * C)))

    slab64, lay64 = _pack([
        ("w_lin", w_lin), ("w_ih_e", w_ih_e), ("w_hh_e", w_hh_e),
        ("w_ih_d", w_ih_d), ("w_hh_d", w_hh_d), ("w_xl", w_xl),
        ("b_lin", b_lin), ("b_e", b_e), ("b_d", b_d), ("b_xl", b_xl),
    ])
    slab128, lay128 = _pack([
        ("w_ml", w_ml), ("w_head", w_head),
        ("b_ml", b_ml), ("b_head", b_head),
    ])
    return slab64, lay64, slab128, lay128, out_pad


# ----------------------------------------------------------------------------
# Forward wrapper
# ----------------------------------------------------------------------------
def make_mmfall_forward(lay64, lay128, out_pad, *, B, T, P, C,
                        lin_hidden, rnn_hidden):
    H, Hr = lin_hidden, rnn_hidden
    PC = P * C
    B_pad = _round_up(B, 8)
    S = T * B
    SP = T * B_pad
    Dw = max(PC, H)

    kernel = functools.partial(
        mmfall_kernel, B=B, B_pad=B_pad, T=T, H=H, Hr=Hr, PC=PC,
        lay64=lay64, lay128=lay128)

    vmem = pl.BlockSpec(memory_space=pltpu.MemorySpace.VMEM)

    # advisory cost estimate (tiny kernel; keep XLA from over-reserving)
    flops = 2 * (SP * PC * H + SP * H * 2 * H + SP * H * Hr
                 + T * B_pad * Hr * Hr + B_pad * Hr * Hr
                 + S * (Hr * Hr + Hr * H + H * out_pad))
    transc = 2 * SP * H + T * B_pad * Hr + S * (Hr + H)
    w64_rows = max(r0 + _round_up(nr, 8) for r0, nr, _ in lay64.values())
    w64_w = max(nc for _, _, nc in lay64.values())
    w128_rows = max(r0 + _round_up(nr, 8) for r0, nr, _ in lay128.values())
    w128_w = max(nc for _, _, nc in lay128.values())
    nbytes = 4 * (2 * SP * Dw + w64_rows * w64_w + w128_rows * w128_w
                  + S * out_pad + SP * 2 * H)

    call = pl.pallas_call(
        kernel,
        out_shape=(
            jax.ShapeDtypeStruct((S, out_pad), jnp.float32),   # cat(mean, logvar), padded
            jax.ShapeDtypeStruct((SP, 2 * H), jnp.float32),    # cat(z_mean, z_logvar)
        ),
        in_specs=[vmem, vmem, vmem],
        out_specs=(vmem, vmem),
        compiler_params=pltpu.CompilerParams(vmem_limit_bytes=2 * 1024 * 1024),
        cost_estimate=pl.CostEstimate(
            flops=flops, transcendentals=transc, bytes_accessed=nbytes),
    )

    def forward(slab64, slab128, x, eps):
        """x: (B, T, P, C) f32 (torch layout).  eps: (B, T, H) f32."""
        # time-major rows (t*B_pad + b), batch zero-padded to 8 sublanes,
        # x and epsilon packed into a single data slab (one DMA).
        x_tm = jnp.transpose(x.reshape(B, T, PC), (1, 0, 2))      # (T, B, PC)
        eps_tm = jnp.transpose(eps, (1, 0, 2))                    # (T, B, H)
        x_tm = jnp.pad(x_tm, ((0, 0), (0, B_pad - B), (0, Dw - PC)))
        eps_tm = jnp.pad(eps_tm, ((0, 0), (0, B_pad - B), (0, Dw - H)))
        data = jnp.concatenate(
            [x_tm.reshape(SP, Dw), eps_tm.reshape(SP, Dw)], axis=0)

        out_padded, zml = call(data, slab64, slab128)

        # torch: unsqueeze(2).repeat((1, 1, P, 1)) -> (1, T*B, P, 2*C)
        head = out_padded[:, :2 * C]
        out = jnp.broadcast_to(head[None, :, None, :], (1, S, P, 2 * C))

        # un-fuse & restore (B, T, H) ordering for the caches
        zml_bt = jnp.transpose(zml.reshape(T, B_pad, 2 * H)[:, :B, :],
                               (1, 0, 2))
        return out, zml_bt[..., :H], zml_bt[..., H:]

    return jax.jit(forward)


# ----------------------------------------------------------------------------
# Pure-JAX reference (mirror of the torch forward) for verification
# ----------------------------------------------------------------------------
def mmfall_reference(params, x, eps, *, lin_hidden, rnn_hidden):
    (w_lin, b_lin, w_mu, b_mu, w_lv, b_lv,
     w_ih_e, w_hh_e, b_e,
     w_ih_d, w_hh_d, b_d,
     w_xl, b_xl, w_pm, b_pm, w_pv, b_pv) = params
    B, T, P, C = x.shape
    Hr = rnn_hidden

    xf = x.reshape(B, T, P * C)
    h = jnp.tanh(xf @ w_lin + b_lin)
    z_mean = h @ w_mu + b_mu
    z_logvar = h @ w_lv + b_lv
    z = z_mean + jnp.exp(0.5 * z_logvar) * eps

    hc = jnp.zeros((B, Hr), jnp.float32)
    for t in range(T):
        hc = jnp.tanh(z[:, t, :] @ w_ih_e + hc @ w_hh_e + b_e)

    # .repeat((1, T, 1)) on (B, Hr): batch=1, seq=T*B, input s -> hc[s % B]
    S = T * B
    hd = jnp.zeros((1, Hr), jnp.float32)
    states = []
    for s in range(S):
        hd = jnp.tanh(hc[s % B:s % B + 1] @ w_ih_d + hd @ w_hh_d + b_d)
        states.append(hd)
    dec_fwd = jnp.concatenate(states, axis=0)                    # (S, Hr)
    dec = dec_fwd[::-1]                                          # torch.flip dim 1

    lat = jnp.tanh(dec @ w_xl + b_xl)
    head = jnp.concatenate([lat @ w_pm + b_pm, lat @ w_pv + b_pv], axis=-1)
    out = jnp.broadcast_to(head[None, :, None, :], (1, S, P, 2 * C))
    return out, z_mean, z_logvar


if __name__ == "__main__":
    # small shapes: batch=2, num_frames=8, num_points=16, channels=4
    B, T, P, C = 2, 8, 16, 4
    LIN_HIDDEN = 64
    RNN_HIDDEN = 64

    root = jax.random.PRNGKey(0)
    k_x, k_eps, k_params = jax.random.split(root, 3)

    x = jax.random.normal(k_x, (B, T, P, C), jnp.float32)
    # TODO(synk): torch draws epsilon with its own CPU RNG; distributionally
    # equivalent N(0,1) noise is drawn here with jax.random instead.
    eps = jax.random.normal(k_eps, (B, T, LIN_HIDDEN), jnp.float32)

    params = init_mmfall_params(k_params, P, C, LIN_HIDDEN, RNN_HIDDEN)

    # one-time weight fusion + slab packing (hoisted out of the forward path)
    slab64, lay64, slab128, lay128, out_pad = prepare_packed_params(
        params, channels=C, lin_hidden=LIN_HIDDEN, rnn_hidden=RNN_HIDDEN)

    forward = make_mmfall_forward(
        lay64, lay128, out_pad,
        B=B, T=T, P=P, C=C, lin_hidden=LIN_HIDDEN, rnn_hidden=RNN_HIDDEN)

    out, z_mean_cache, z_logvar_cache = forward(slab64, slab128, x, eps)
    jax.block_until_ready(out)

    assert out.shape == (1, T * B, P, 2 * C), out.shape
    assert z_mean_cache.shape == (B, T, LIN_HIDDEN)
    assert z_logvar_cache.shape == (B, T, LIN_HIDDEN)
    assert bool(jnp.all(jnp.isfinite(out)))

    # correctness check vs pure-JAX reference (loose tol for MXU f32 passes)
    ref_out, ref_zm, ref_zlv = mmfall_reference(
        params, x, eps, lin_hidden=LIN_HIDDEN, rnn_hidden=RNN_HIDDEN)
    for got, want in ((out, ref_out), (z_mean_cache, ref_zm),
                      (z_logvar_cache, ref_zlv)):
        diff = float(jnp.max(jnp.abs(got - want)))
        assert diff < 2e-2, f"max abs diff {diff}"

    print("KERNEL_OK")
</pallas_src>

<mosaic_0001>
module attributes {stable_mosaic.version = 11 : i64} {
  func.func @mmfall_kernel(%arg0: memref<128x64xf32, #tpu.memory_space<vmem>>, %arg1: memref<416x64xf32, #tpu.memory_space<vmem>>, %arg2: memref<144x128xf32, #tpu.memory_space<vmem>>, %arg3: memref<16x128xf32, #tpu.memory_space<vmem>>, %arg4: memref<64x128xf32, #tpu.memory_space<vmem>>) attributes {dimension_semantics = [], scalar_prefetch = 0 : i64, scratch_operands = 0 : i64, tpu.core_type = #tpu.core_type<tc>} {
    %c0 = arith.constant 0 : index
    %c0_0 = arith.constant 0 : index
    %0 = vector.load %arg0[%c0, %c0_0] : memref<128x64xf32, #tpu.memory_space<vmem>>, vector<64x64xf32>
    %c64 = arith.constant 64 : index
    %c0_1 = arith.constant 0 : index
    %1 = vector.load %arg0[%c64, %c0_1] : memref<128x64xf32, #tpu.memory_space<vmem>>, vector<64x64xf32>
    %c0_2 = arith.constant 0 : index
    %c0_3 = arith.constant 0 : index
    %2 = vector.load %arg1[%c0_2, %c0_3] : memref<416x64xf32, #tpu.memory_space<vmem>>, vector<64x64xf32>
    %cst = arith.constant dense<0.000000e+00> : vector<64x64xf32>
    %3 = tpu.matmul %0, %2, %cst {dimension_numbers = #tpu.dot_dimension_numbers<[1], [0], [0], [1], [0, 0, 1, 1], [], []>} : vector<64x64xf32>, vector<64x64xf32>, vector<64x64xf32> -> vector<64x64xf32>
    %c384 = arith.constant 384 : index
    %c0_4 = arith.constant 0 : index
    %4 = vector.load %arg1[%c384, %c0_4] : memref<416x64xf32, #tpu.memory_space<vmem>>, vector<1x64xf32>
    %5 = vector.broadcast %4 : vector<1x64xf32> to vector<64x64xf32>
    %6 = arith.addf %3, %5 : vector<64x64xf32>
    %7 = math.tanh %6 : vector<64x64xf32>
    %c0_5 = arith.constant 0 : index
    %c0_6 = arith.constant 0 : index
    %8 = vector.load %arg2[%c0_5, %c0_6] : memref<144x128xf32, #tpu.memory_space<vmem>>, vector<64x128xf32>
    %cst_7 = arith.constant dense<0.000000e+00> : vector<64x128xf32>
    %9 = tpu.matmul %7, %8, %cst_7 {dimension_numbers = #tpu.dot_dimension_numbers<[1], [0], [0], [1], [0, 0, 1, 1], [], []>} : vector<64x64xf32>, vector<64x128xf32>, vector<64x128xf32> -> vector<64x128xf32>
    %c128 = arith.constant 128 : index
    %c0_8 = arith.constant 0 : index
    %10 = vector.load %arg2[%c128, %c0_8] : memref<144x128xf32, #tpu.memory_space<vmem>>, vector<1x128xf32>
    %11 = vector.broadcast %10 : vector<1x128xf32> to vector<64x128xf32>
    %12 = arith.addf %9, %11 : vector<64x128xf32>
    %c0_9 = arith.constant 0 : index
    %c0_10 = arith.constant 0 : index
    %13 = vector.load %arg4[%c0_9, %c0_10] : memref<64x128xf32, #tpu.memory_space<vmem>>, vector<64x128xf32>
    tpu.vector_store %arg4[%c0_9, %c0_10], %12 {strides = array<i32>} : memref<64x128xf32, #tpu.memory_space<vmem>>, vector<64x128xf32>,
    %14 = vector.extract_strided_slice %12 {offsets = [0, 0], sizes = [64, 64], strides = [1, 1]} : vector<64x128xf32> to vector<64x64xf32>
    %15 = vector.extract_strided_slice %12 {offsets = [0, 64], sizes = [64, 64], strides = [1, 1]} : vector<64x128xf32> to vector<64x64xf32>
    %cst_11 = arith.constant 5.000000e-01 : f32
    %16 = vector.broadcast %cst_11 : f32 to vector<64x64xf32>
    %17 = arith.mulf %16, %15 : vector<64x64xf32>
    %18 = math.exp %17 : vector<64x64xf32>
    %19 = arith.mulf %18, %1 : vector<64x64xf32>
    %20 = arith.addf %14, %19 : vector<64x64xf32>
    %c64_12 = arith.constant 64 : index
    %c0_13 = arith.constant 0 : index
    %21 = vector.load %arg1[%c64_12, %c0_13] : memref<416x64xf32, #tpu.memory_space<vmem>>, vector<64x64xf32>
    %cst_14 = arith.constant dense<0.000000e+00> : vector<64x64xf32>
    %22 = tpu.matmul %20, %21, %cst_14 {dimension_numbers = #tpu.dot_dimension_numbers<[1], [0], [0], [1], [0, 0, 1, 1], [], []>} : vector<64x64xf32>, vector<64x64xf32>, vector<64x64xf32> -> vector<64x64xf32>
    %c392 = arith.constant 392 : index
    %c0_15 = arith.constant 0 : index
    %23 = vector.load %arg1[%c392, %c0_15] : memref<416x64xf32, #tpu.memory_space<vmem>>, vector<1x64xf32>
    %24 = vector.broadcast %23 : vector<1x64xf32> to vector<64x64xf32>
    %25 = arith.addf %22, %24 : vector<64x64xf32>
    %c128_16 = arith.constant 128 : index
    %c0_17 = arith.constant 0 : index
    %26 = vector.load %arg1[%c128_16, %c0_17] : memref<416x64xf32, #tpu.memory_space<vmem>>, vector<64x64xf32>
    %cst_18 = arith.constant 0.000000e+00 : f32
    %27 = vector.broadcast %cst_18 : f32 to vector<8x64xf32>
    %28 = vector.extract_strided_slice %25 {offsets = [0, 0], sizes = [8, 64], strides = [1, 1]} : vector<64x64xf32> to vector<8x64xf32>
    %cst_19 = arith.constant dense<0.000000e+00> : vector<8x64xf32>
    %29 = tpu.matmul %27, %26, %cst_19 {dimension_numbers = #tpu.dot_dimension_numbers<[1], [0], [0], [1], [0, 0, 1, 1], [], []>} : vector<8x64xf32>, vector<64x64xf32>, vector<8x64xf32> -> vector<8x64xf32>
    %30 = arith.addf %28, %29 : vector<8x64xf32>
    %31 = math.tanh %30 : vector<8x64xf32>
    %32 = vector.extract_strided_slice %25 {offsets = [8, 0], sizes = [8, 64], strides = [1, 1]} : vector<64x64xf32> to vector<8x64xf32>
    %cst_20 = arith.constant dense<0.000000e+00> : vector<8x64xf32>
    %33 = tpu.matmul %31, %26, %cst_20 {dimension_numbers = #tpu.dot_dimension_numbers<[1], [0], [0], [1], [0, 0, 1, 1], [], []>} : vector<8x64xf32>, vector<64x64xf32>, vector<8x64xf32> -> vector<8x64xf32>
    %34 = arith.addf %32, %33 : vector<8x64xf32>
    %35 = math.tanh %34 : vector<8x64xf32>
    %36 = vector.extract_strided_slice %25 {offsets = [16, 0], sizes = [8, 64], strides = [1, 1]} : vector<64x64xf32> to vector<8x64xf32>
    %cst_21 = arith.constant dense<0.000000e+00> : vector<8x64xf32>
    %37 = tpu.matmul %35, %26, %cst_21 {dimension_numbers = #tpu.dot_dimension_numbers<[1], [0], [0], [1], [0, 0, 1, 1], [], []>} : vector<8x64xf32>, vector<64x64xf32>, vector<8x64xf32> -> vector<8x64xf32>
    %38 = arith.addf %36, %37 : vector<8x64xf32>
    %39 = math.tanh %38 : vector<8x64xf32>
    %40 = vector.extract_strided_slice %25 {offsets = [24, 0], sizes = [8, 64], strides = [1, 1]} : vector<64x64xf32> to vector<8x64xf32>
    %cst_22 = arith.constant dense<0.000000e+00> : vector<8x64xf32>
    %41 = tpu.matmul %39, %26, %cst_22 {dimension_numbers = #tpu.dot_dimension_numbers<[1], [0], [0], [1], [0, 0, 1, 1], [], []>} : vector<8x64xf32>, vector<64x64xf32>, vector<8x64xf32> -> vector<8x64xf32>
    %42 = arith.addf %40, %41 : vector<8x64xf32>
    %43 = math.tanh %42 : vector<8x64xf32>
    %44 = vector.extract_strided_slice %25 {offsets = [32, 0], sizes = [8, 64], strides = [1, 1]} : vector<64x64xf32> to vector<8x64xf32>
    %cst_23 = arith.constant dense<0.000000e+00> : vector<8x64xf32>
    %45 = tpu.matmul %43, %26, %cst_23 {dimension_numbers = #tpu.dot_dimension_numbers<[1], [0], [0], [1], [0, 0, 1, 1], [], []>} : vector<8x64xf32>, vector<64x64xf32>, vector<8x64xf32> -> vector<8x64xf32>
    %46 = arith.addf %44, %45 : vector<8x64xf32>
    %47 = math.tanh %46 : vector<8x64xf32>
    %48 = vector.extract_strided_slice %25 {offsets = [40, 0], sizes = [8, 64], strides = [1, 1]} : vector<64x64xf32> to vector<8x64xf32>
    %cst_24 = arith.constant dense<0.000000e+00> : vector<8x64xf32>
    %49 = tpu.matmul %47, %26, %cst_24 {dimension_numbers = #tpu.dot_dimension_numbers<[1], [0], [0], [1], [0, 0, 1, 1], [], []>} : vector<8x64xf32>, vector<64x64xf32>, vector<8x64xf32> -> vector<8x64xf32>
    %50 = arith.addf %48, %49 : vector<8x64xf32>
    %51 = math.tanh %50 : vector<8x64xf32>
    %52 = vector.extract_strided_slice %25 {offsets = [48, 0], sizes = [8, 64], strides = [1, 1]} : vector<64x64xf32> to vector<8x64xf32>
    %cst_25 = arith.constant dense<0.000000e+00> : vector<8x64xf32>
    %53 = tpu.matmul %51, %26, %cst_25 {dimension_numbers = #tpu.dot_dimension_numbers<[1], [0], [0], [1], [0, 0, 1, 1], [], []>} : vector<8x64xf32>, vector<64x64xf32>, vector<8x64xf32> -> vector<8x64xf32>
    %54 = arith.addf %52, %53 : vector<8x64xf32>
    %55 = math.tanh %54 : vector<8x64xf32>
    %56 = vector.extract_strided_slice %25 {offsets = [56, 0], sizes = [8, 64], strides = [1, 1]} : vector<64x64xf32> to vector<8x64xf32>
    %cst_26 = arith.constant dense<0.000000e+00> : vector<8x64xf32>
    %57 = tpu.matmul %55, %26, %cst_26 {dimension_numbers = #tpu.dot_dimension_numbers<[1], [0], [0], [1], [0, 0, 1, 1], [], []>} : vector<8x64xf32>, vector<64x64xf32>, vector<8x64xf32> -> vector<8x64xf32>
    %58 = arith.addf %56, %57 : vector<8x64xf32>
    %59 = math.tanh %58 : vector<8x64xf32>
    %c192 = arith.constant 192 : index
    %c0_27 = arith.constant 0 : index
    %60 = vector.load %arg1[%c192, %c0_27] : memref<416x64xf32, #tpu.memory_space<vmem>>, vector<64x64xf32>
    %cst_28 = arith.constant dense<0.000000e+00> : vector<8x64xf32>
    %61 = tpu.matmul %59, %60, %cst_28 {dimension_numbers = #tpu.dot_dimension_numbers<[1], [0], [0], [1], [0, 0, 1, 1], [], []>} : vector<8x64xf32>, vector<64x64xf32>, vector<8x64xf32> -> vector<8x64xf32>
    %c400 = arith.constant 400 : index
    %c0_29 = arith.constant 0 : index
    %62 = vector.load %arg1[%c400, %c0_29] : memref<416x64xf32, #tpu.memory_space<vmem>>, vector<1x64xf32>
    %63 = vector.broadcast %62 : vector<1x64xf32> to vector<8x64xf32>
    %64 = arith.addf %61, %63 : vector<8x64xf32>
    %c256 = arith.constant 256 : index
    %c0_30 = arith.constant 0 : index
    %65 = vector.load %arg1[%c256, %c0_30] : memref<416x64xf32, #tpu.memory_space<vmem>>, vector<64x64xf32>
    %c320 = arith.constant 320 : index
    %c0_31 = arith.constant 0 : index
    %66 = vector.load %arg1[%c320, %c0_31] : memref<416x64xf32, #tpu.memory_space<vmem>>, vector<64x64xf32>
    %c408 = arith.constant 408 : index
    %c0_32 = arith.constant 0 : index
    %67 = vector.load %arg1[%c408, %c0_32] : memref<416x64xf32, #tpu.memory_space<vmem>>, vector<1x64xf32>
    %c64_33 = arith.constant 64 : index
    %c0_34 = arith.constant 0 : index
    %68 = vector.load %arg2[%c64_33, %c0_34] : memref<144x128xf32, #tpu.memory_space<vmem>>, vector<64x128xf32>
    %c136 = arith.constant 136 : index
    %c0_35 = arith.constant 0 : index
    %69 = vector.load %arg2[%c136, %c0_35] : memref<144x128xf32, #tpu.memory_space<vmem>>, vector<1x128xf32>
    %cst_36 = arith.constant 0.000000e+00 : f32
    %70 = vector.broadcast %cst_36 : f32 to vector<1x64xf32>
    %71 = vector.extract_strided_slice %64 {offsets = [0, 0], sizes = [1, 64], strides = [1, 1]} : vector<8x64xf32> to vector<1x64xf32>
    %cst_37 = arith.constant dense<0.000000e+00> : vector<1x64xf32>
    %72 = tpu.matmul %70, %65, %cst_37 {dimension_numbers = #tpu.dot_dimension_numbers<[1], [0], [0], [1], [0, 0, 1, 1], [], []>} : vector<1x64xf32>, vector<64x64xf32>, vector<1x64xf32> -> vector<1x64xf32>
    %73 = arith.addf %71, %72 : vector<1x64xf32>
    %74 = math.tanh %73 : vector<1x64xf32>
    %cst_38 = arith.constant dense<0.000000e+00> : vector<1x64xf32>
    %75 = tpu.matmul %74, %66, %cst_38 {dimension_numbers = #tpu.dot_dimension_numbers<[1], [0], [0], [1], [0, 0, 1, 1], [], []>} : vector<1x64xf32>, vector<64x64xf32>, vector<1x64xf32> -> vector<1x64xf32>
    %76 = arith.addf %75, %67 : vector<1x64xf32>
    %77 = math.tanh %76 : vector<1x64xf32>
    %cst_39 = arith.constant dense<0.000000e+00> : vector<1x128xf32>
    %78 = tpu.matmul %77, %68, %cst_39 {dimension_numbers = #tpu.dot_dimension_numbers<[1], [0], [0], [1], [0, 0, 1, 1], [], []>} : vector<1x64xf32>, vector<64x128xf32>, vector<1x128xf32> -> vector<1x128xf32>
    %79 = arith.addf %78, %69 : vector<1x128xf32>
    %c15 = arith.constant 15 : index
    %c0_40 = arith.constant 0 : index
    %80 = vector.load %arg3[%c15, %c0_40] : memref<16x128xf32, #tpu.memory_space<vmem>>, vector<1x128xf32>
    tpu.vector_store %arg3[%c15, %c0_40], %79 {strides = array<i32>} : memref<16x128xf32, #tpu.memory_space<vmem>>, vector<1x128xf32>,
    %81 = vector.extract_strided_slice %64 {offsets = [1, 0], sizes = [1, 64], strides = [1, 1]} : vector<8x64xf32> to vector<1x64xf32>
    %cst_41 = arith.constant dense<0.000000e+00> : vector<1x64xf32>
    %82 = tpu.matmul %74, %65, %cst_41 {dimension_numbers = #tpu.dot_dimension_numbers<[1], [0], [0], [1], [0, 0, 1, 1], [], []>} : vector<1x64xf32>, vector<64x64xf32>, vector<1x64xf32> -> vector<1x64xf32>
    %83 = arith.addf %81, %82 : vector<1x64xf32>
    %84 = math.tanh %83 : vector<1x64xf32>
    %cst_42 = arith.constant dense<0.000000e+00> : vector<1x64xf32>
    %85 = tpu.matmul %84, %66, %cst_42 {dimension_numbers = #tpu.dot_dimension_numbers<[1], [0], [0], [1], [0, 0, 1, 1], [], []>} : vector<1x64xf32>, vector<64x64xf32>, vector<1x64xf32> -> vector<1x64xf32>
    %86 = arith.addf %85, %67 : vector<1x64xf32>
    %87 = math.tanh %86 : vector<1x64xf32>
    %cst_43 = arith.constant dense<0.000000e+00> : vector<1x128xf32>
    %88 = tpu.matmul %87, %68, %cst_43 {dimension_numbers = #tpu.dot_dimension_numbers<[1], [0], [0], [1], [0, 0, 1, 1], [], []>} : vector<1x64xf32>, vector<64x128xf32>, vector<1x128xf32> -> vector<1x128xf32>
    %89 = arith.addf %88, %69 : vector<1x128xf32>
    %c14 = arith.constant 14 : index
    %c0_44 = arith.constant 0 : index
    %90 = vector.load %arg3[%c14, %c0_44] : memref<16x128xf32, #tpu.memory_space<vmem>>, vector<1x128xf32>
    tpu.vector_store %arg3[%c14, %c0_44], %89 {strides = array<i32>} : memref<16x128xf32, #tpu.memory_space<vmem>>, vector<1x128xf32>,
    %91 = vector.extract_strided_slice %64 {offsets = [0, 0], sizes = [1, 64], strides = [1, 1]} : vector<8x64xf32> to vector<1x64xf32>
    %cst_45 = arith.constant dense<0.000000e+00> : vector<1x64xf32>
    %92 = tpu.matmul %84, %65, %cst_45 {dimension_numbers = #tpu.dot_dimension_numbers<[1], [0], [0], [1], [0, 0, 1, 1], [], []>} : vector<1x64xf32>, vector<64x64xf32>, vector<1x64xf32> -> vector<1x64xf32>
    %93 = arith.addf %91, %92 : vector<1x64xf32>
    %94 = math.tanh %93 : vector<1x64xf32>
    %cst_46 = arith.constant dense<0.000000e+00> : vector<1x64xf32>
    %95 = tpu.matmul %94, %66, %cst_46 {dimension_numbers = #tpu.dot_dimension_numbers<[1], [0], [0], [1], [0, 0, 1, 1], [], []>} : vector<1x64xf32>, vector<64x64xf32>, vector<1x64xf32> -> vector<1x64xf32>
    %96 = arith.addf %95, %67 : vector<1x64xf32>
    %97 = math.tanh %96 : vector<1x64xf32>
    %cst_47 = arith.constant dense<0.000000e+00> : vector<1x128xf32>
    %98 = tpu.matmul %97, %68, %cst_47 {dimension_numbers = #tpu.dot_dimension_numbers<[1], [0], [0], [1], [0, 0, 1, 1], [], []>} : vector<1x64xf32>, vector<64x128xf32>, vector<1x128xf32> -> vector<1x128xf32>
    %99 = arith.addf %98, %69 : vector<1x128xf32>
    %c13 = arith.constant 13 : index
    %c0_48 = arith.constant 0 : index
    %100 = vector.load %arg3[%c13, %c0_48] : memref<16x128xf32, #tpu.memory_space<vmem>>, vector<1x128xf32>
    tpu.vector_store %arg3[%c13, %c0_48], %99 {strides = array<i32>} : memref<16x128xf32, #tpu.memory_space<vmem>>, vector<1x128xf32>,
    %101 = vector.extract_strided_slice %64 {offsets = [1, 0], sizes = [1, 64], strides = [1, 1]} : vector<8x64xf32> to vector<1x64xf32>
    %cst_49 = arith.constant dense<0.000000e+00> : vector<1x64xf32>
    %102 = tpu.matmul %94, %65, %cst_49 {dimension_numbers = #tpu.dot_dimension_numbers<[1], [0], [0], [1], [0, 0, 1, 1], [], []>} : vector<1x64xf32>, vector<64x64xf32>, vector<1x64xf32> -> vector<1x64xf32>
    %103 = arith.addf %101, %102 : vector<1x64xf32>
    %104 = math.tanh %103 : vector<1x64xf32>
    %cst_50 = arith.constant dense<0.000000e+00> : vector<1x64xf32>
    %105 = tpu.matmul %104, %66, %cst_50 {dimension_numbers = #tpu.dot_dimension_numbers<[1], [0], [0], [1], [0, 0, 1, 1], [], []>} : vector<1x64xf32>, vector<64x64xf32>, vector<1x64xf32> -> vector<1x64xf32>
    %106 = arith.addf %105, %67 : vector<1x64xf32>
    %107 = math.tanh %106 : vector<1x64xf32>
    %cst_51 = arith.constant dense<0.000000e+00> : vector<1x128xf32>
    %108 = tpu.matmul %107, %68, %cst_51 {dimension_numbers = #tpu.dot_dimension_numbers<[1], [0], [0], [1], [0, 0, 1, 1], [], []>} : vector<1x64xf32>, vector<64x128xf32>, vector<1x128xf32> -> vector<1x128xf32>
    %109 = arith.addf %108, %69 : vector<1x128xf32>
    %c12 = arith.constant 12 : index
    %c0_52 = arith.constant 0 : index
    %110 = vector.load %arg3[%c12, %c0_52] : memref<16x128xf32, #tpu.memory_space<vmem>>, vector<1x128xf32>
    tpu.vector_store %arg3[%c12, %c0_52], %109 {strides = array<i32>} : memref<16x128xf32, #tpu.memory_space<vmem>>, vector<1x128xf32>,
    %111 = vector.extract_strided_slice %64 {offsets = [0, 0], sizes = [1, 64], strides = [1, 1]} : vector<8x64xf32> to vector<1x64xf32>
    %cst_53 = arith.constant dense<0.000000e+00> : vector<1x64xf32>
    %112 = tpu.matmul %104, %65, %cst_53 {dimension_numbers = #tpu.dot_dimension_numbers<[1], [0], [0], [1], [0, 0, 1, 1], [], []>} : vector<1x64xf32>, vector<64x64xf32>, vector<1x64xf32> -> vector<1x64xf32>
    %113 = arith.addf %111, %112 : vector<1x64xf32>
    %114 = math.tanh %113 : vector<1x64xf32>
    %cst_54 = arith.constant dense<0.000000e+00> : vector<1x64xf32>
    %115 = tpu.matmul %114, %66, %cst_54 {dimension_numbers = #tpu.dot_dimension_numbers<[1], [0], [0], [1], [0, 0, 1, 1], [], []>} : vector<1x64xf32>, vector<64x64xf32>, vector<1x64xf32> -> vector<1x64xf32>
    %116 = arith.addf %115, %67 : vector<1x64xf32>
    %117 = math.tanh %116 : vector<1x64xf32>
    %cst_55 = arith.constant dense<0.000000e+00> : vector<1x128xf32>
    %118 = tpu.matmul %117, %68, %cst_55 {dimension_numbers = #tpu.dot_dimension_numbers<[1], [0], [0], [1], [0, 0, 1, 1], [], []>} : vector<1x64xf32>, vector<64x128xf32>, vector<1x128xf32> -> vector<1x128xf32>
    %119 = arith.addf %118, %69 : vector<1x128xf32>
    %c11 = arith.constant 11 : index
    %c0_56 = arith.constant 0 : index
    %120 = vector.load %arg3[%c11, %c0_56] : memref<16x128xf32, #tpu.memory_space<vmem>>, vector<1x128xf32>
    tpu.vector_store %arg3[%c11, %c0_56], %119 {strides = array<i32>} : memref<16x128xf32, #tpu.memory_space<vmem>>, vector<1x128xf32>,
    %121 = vector.extract_strided_slice %64 {offsets = [1, 0], sizes = [1, 64], strides = [1, 1]} : vector<8x64xf32> to vector<1x64xf32>
    %cst_57 = arith.constant dense<0.000000e+00> : vector<1x64xf32>
    %122 = tpu.matmul %114, %65, %cst_57 {dimension_numbers = #tpu.dot_dimension_numbers<[1], [0], [0], [1], [0, 0, 1, 1], [], []>} : vector<1x64xf32>, vector<64x64xf32>, vector<1x64xf32> -> vector<1x64xf32>
    %123 = arith.addf %121, %122 : vector<1x64xf32>
    %124 = math.tanh %123 : vector<1x64xf32>
    %cst_58 = arith.constant dense<0.000000e+00> : vector<1x64xf32>
    %125 = tpu.matmul %124, %66, %cst_58 {dimension_numbers = #tpu.dot_dimension_numbers<[1], [0], [0], [1], [0, 0, 1, 1], [], []>} : vector<1x64xf32>, vector<64x64xf32>, vector<1x64xf32> -> vector<1x64xf32>
    %126 = arith.addf %125, %67 : vector<1x64xf32>
    %127 = math.tanh %126 : vector<1x64xf32>
    %cst_59 = arith.constant dense<0.000000e+00> : vector<1x128xf32>
    %128 = tpu.matmul %127, %68, %cst_59 {dimension_numbers = #tpu.dot_dimension_numbers<[1], [0], [0], [1], [0, 0, 1, 1], [], []>} : vector<1x64xf32>, vector<64x128xf32>, vector<1x128xf32> -> vector<1x128xf32>
    %129 = arith.addf %128, %69 : vector<1x128xf32>
    %c10 = arith.constant 10 : index
    %c0_60 = arith.constant 0 : index
    %130 = vector.load %arg3[%c10, %c0_60] : memref<16x128xf32, #tpu.memory_space<vmem>>, vector<1x128xf32>
    tpu.vector_store %arg3[%c10, %c0_60], %129 {strides = array<i32>} : memref<16x128xf32, #tpu.memory_space<vmem>>, vector<1x128xf32>,
    %131 = vector.extract_strided_slice %64 {offsets = [0, 0], sizes = [1, 64], strides = [1, 1]} : vector<8x64xf32> to vector<1x64xf32>
    %cst_61 = arith.constant dense<0.000000e+00> : vector<1x64xf32>
    %132 = tpu.matmul %124, %65, %cst_61 {dimension_numbers = #tpu.dot_dimension_numbers<[1], [0], [0], [1], [0, 0, 1, 1], [], []>} : vector<1x64xf32>, vector<64x64xf32>, vector<1x64xf32> -> vector<1x64xf32>
    %133 = arith.addf %131, %132 : vector<1x64xf32>
    %134 = math.tanh %133 : vector<1x64xf32>
    %cst_62 = arith.constant dense<0.000000e+00> : vector<1x64xf32>
    %135 = tpu.matmul %134, %66, %cst_62 {dimension_numbers = #tpu.dot_dimension_numbers<[1], [0], [0], [1], [0, 0, 1, 1], [], []>} : vector<1x64xf32>, vector<64x64xf32>, vector<1x64xf32> -> vector<1x64xf32>
    %136 = arith.addf %135, %67 : vector<1x64xf32>
    %137 = math.tanh %136 : vector<1x64xf32>
    %cst_63 = arith.constant dense<0.000000e+00> : vector<1x128xf32>
    %138 = tpu.matmul %137, %68, %cst_63 {dimension_numbers = #tpu.dot_dimension_numbers<[1], [0], [0], [1], [0, 0, 1, 1], [], []>} : vector<1x64xf32>, vector<64x128xf32>, vector<1x128xf32> -> vector<1x128xf32>
    %139 = arith.addf %138, %69 : vector<1x128xf32>
    %c9 = arith.constant 9 : index
    %c0_64 = arith.constant 0 : index
    %140 = vector.load %arg3[%c9, %c0_64] : memref<16x128xf32, #tpu.memory_space<vmem>>, vector<1x128xf32>
    tpu.vector_store %arg3[%c9, %c0_64], %139 {strides = array<i32>} : memref<16x128xf32, #tpu.memory_space<vmem>>, vector<1x128xf32>,
    %141 = vector.extract_strided_slice %64 {offsets = [1, 0], sizes = [1, 64], strides = [1, 1]} : vector<8x64xf32> to vector<1x64xf32>
    %cst_65 = arith.constant dense<0.000000e+00> : vector<1x64xf32>
    %142 = tpu.matmul %134, %65, %cst_65 {dimension_numbers = #tpu.dot_dimension_numbers<[1], [0], [0], [1], [0, 0, 1, 1], [], []>} : vector<1x64xf32>, vector<64x64xf32>, vector<1x64xf32> -> vector<1x64xf32>
    %143 = arith.addf %141, %142 : vector<1x64xf32>
    %144 = math.tanh %143 : vector<1x64xf32>
    %cst_66 = arith.constant dense<0.000000e+00> : vector<1x64xf32>
    %145 = tpu.matmul %144, %66, %cst_66 {dimension_numbers = #tpu.dot_dimension_numbers<[1], [0], [0], [1], [0, 0, 1, 1], [], []>} : vector<1x64xf32>, vector<64x64xf32>, vector<1x64xf32> -> vector<1x64xf32>
    %146 = arith.addf %145, %67 : vector<1x64xf32>
    %147 = math.tanh %146 : vector<1x64xf32>
    %cst_67 = arith.constant dense<0.000000e+00> : vector<1x128xf32>
    %148 = tpu.matmul %147, %68, %cst_67 {dimension_numbers = #tpu.dot_dimension_numbers<[1], [0], [0], [1], [0, 0, 1, 1], [], []>} : vector<1x64xf32>, vector<64x128xf32>, vector<1x128xf32> -> vector<1x128xf32>
    %149 = arith.addf %148, %69 : vector<1x128xf32>
    %c8 = arith.constant 8 : index
    %c0_68 = arith.constant 0 : index
    %150 = vector.load %arg3[%c8, %c0_68] : memref<16x128xf32, #tpu.memory_space<vmem>>, vector<1x128xf32>
    tpu.vector_store %arg3[%c8, %c0_68], %149 {strides = array<i32>} : memref<16x128xf32, #tpu.memory_space<vmem>>, vector<1x128xf32>,
    %151 = vector.extract_strided_slice %64 {offsets = [0, 0], sizes = [1, 64], strides = [1, 1]} : vector<8x64xf32> to vector<1x64xf32>
    %cst_69 = arith.constant dense<0.000000e+00> : vector<1x64xf32>
    %152 = tpu.matmul %144, %65, %cst_69 {dimension_numbers = #tpu.dot_dimension_numbers<[1], [0], [0], [1], [0, 0, 1, 1], [], []>} : vector<1x64xf32>, vector<64x64xf32>, vector<1x64xf32> -> vector<1x64xf32>
    %153 = arith.addf %151, %152 : vector<1x64xf32>
    %154 = math.tanh %153 : vector<1x64xf32>
    %cst_70 = arith.constant dense<0.000000e+00> : vector<1x64xf32>
    %155 = tpu.matmul %154, %66, %cst_70 {dimension_numbers = #tpu.dot_dimension_numbers<[1], [0], [0], [1], [0, 0, 1, 1], [], []>} : vector<1x64xf32>, vector<64x64xf32>, vector<1x64xf32> -> vector<1x64xf32>
    %156 = arith.addf %155, %67 : vector<1x64xf32>
    %157 = math.tanh %156 : vector<1x64xf32>
    %cst_71 = arith.constant dense<0.000000e+00> : vector<1x128xf32>
    %158 = tpu.matmul %157, %68, %cst_71 {dimension_numbers = #tpu.dot_dimension_numbers<[1], [0], [0], [1], [0, 0, 1, 1], [], []>} : vector<1x64xf32>, vector<64x128xf32>, vector<1x128xf32> -> vector<1x128xf32>
    %159 = arith.addf %158, %69 : vector<1x128xf32>
    %c7 = arith.constant 7 : index
    %c0_72 = arith.constant 0 : index
    %160 = vector.load %arg3[%c7, %c0_72] : memref<16x128xf32, #tpu.memory_space<vmem>>, vector<1x128xf32>
    tpu.vector_store %arg3[%c7, %c0_72], %159 {strides = array<i32>} : memref<16x128xf32, #tpu.memory_space<vmem>>, vector<1x128xf32>,
    %161 = vector.extract_strided_slice %64 {offsets = [1, 0], sizes = [1, 64], strides = [1, 1]} : vector<8x64xf32> to vector<1x64xf32>
    %cst_73 = arith.constant dense<0.000000e+00> : vector<1x64xf32>
    %162 = tpu.matmul %154, %65, %cst_73 {dimension_numbers = #tpu.dot_dimension_numbers<[1], [0], [0], [1], [0, 0, 1, 1], [], []>} : vector<1x64xf32>, vector<64x64xf32>, vector<1x64xf32> -> vector<1x64xf32>
    %163 = arith.addf %161, %162 : vector<1x64xf32>
    %164 = math.tanh %163 : vector<1x64xf32>
    %cst_74 = arith.constant dense<0.000000e+00> : vector<1x64xf32>
    %165 = tpu.matmul %164, %66, %cst_74 {dimension_numbers = #tpu.dot_dimension_numbers<[1], [0], [0], [1], [0, 0, 1, 1], [], []>} : vector<1x64xf32>, vector<64x64xf32>, vector<1x64xf32> -> vector<1x64xf32>
    %166 = arith.addf %165, %67 : vector<1x64xf32>
    %167 = math.tanh %166 : vector<1x64xf32>
    %cst_75 = arith.constant dense<0.000000e+00> : vector<1x128xf32>
    %168 = tpu.matmul %167, %68, %cst_75 {dimension_numbers = #tpu.dot_dimension_numbers<[1], [0], [0], [1], [0, 0, 1, 1], [], []>} : vector<1x64xf32>, vector<64x128xf32>, vector<1x128xf32> -> vector<1x128xf32>
    %169 = arith.addf %168, %69 : vector<1x128xf32>
    %c6 = arith.constant 6 : index
    %c0_76 = arith.constant 0 : index
    %170 = vector.load %arg3[%c6, %c0_76] : memref<16x128xf32, #tpu.memory_space<vmem>>, vector<1x128xf32>
    tpu.vector_store %arg3[%c6, %c0_76], %169 {strides = array<i32>} : memref<16x128xf32, #tpu.memory_space<vmem>>, vector<1x128xf32>,
    %171 = vector.extract_strided_slice %64 {offsets = [0, 0], sizes = [1, 64], strides = [1, 1]} : vector<8x64xf32> to vector<1x64xf32>
    %cst_77 = arith.constant dense<0.000000e+00> : vector<1x64xf32>
    %172 = tpu.matmul %164, %65, %cst_77 {dimension_numbers = #tpu.dot_dimension_numbers<[1], [0], [0], [1], [0, 0, 1, 1], [], []>} : vector<1x64xf32>, vector<64x64xf32>, vector<1x64xf32> -> vector<1x64xf32>
    %173 = arith.addf %171, %172 : vector<1x64xf32>
    %174 = math.tanh %173 : vector<1x64xf32>
    %cst_78 = arith.constant dense<0.000000e+00> : vector<1x64xf32>
    %175 = tpu.matmul %174, %66, %cst_78 {dimension_numbers = #tpu.dot_dimension_numbers<[1], [0], [0], [1], [0, 0, 1, 1], [], []>} : vector<1x64xf32>, vector<64x64xf32>, vector<1x64xf32> -> vector<1x64xf32>
    %176 = arith.addf %175, %67 : vector<1x64xf32>
    %177 = math.tanh %176 : vector<1x64xf32>
    %cst_79 = arith.constant dense<0.000000e+00> : vector<1x128xf32>
    %178 = tpu.matmul %177, %68, %cst_79 {dimension_numbers = #tpu.dot_dimension_numbers<[1], [0], [0], [1], [0, 0, 1, 1], [], []>} : vector<1x64xf32>, vector<64x128xf32>, vector<1x128xf32> -> vector<1x128xf32>
    %179 = arith.addf %178, %69 : vector<1x128xf32>
    %c5 = arith.constant 5 : index
    %c0_80 = arith.constant 0 : index
    %180 = vector.load %arg3[%c5, %c0_80] : memref<16x128xf32, #tpu.memory_space<vmem>>, vector<1x128xf32>
    tpu.vector_store %arg3[%c5, %c0_80], %179 {strides = array<i32>} : memref<16x128xf32, #tpu.memory_space<vmem>>, vector<1x128xf32>,
    %181 = vector.extract_strided_slice %64 {offsets = [1, 0], sizes = [1, 64], strides = [1, 1]} : vector<8x64xf32> to vector<1x64xf32>
    %cst_81 = arith.constant dense<0.000000e+00> : vector<1x64xf32>
    %182 = tpu.matmul %174, %65, %cst_81 {dimension_numbers = #tpu.dot_dimension_numbers<[1], [0], [0], [1], [0, 0, 1, 1], [], []>} : vector<1x64xf32>, vector<64x64xf32>, vector<1x64xf32> -> vector<1x64xf32>
    %183 = arith.addf %181, %182 : vector<1x64xf32>
    %184 = math.tanh %183 : vector<1x64xf32>
    %cst_82 = arith.constant dense<0.000000e+00> : vector<1x64xf32>
    %185 = tpu.matmul %184, %66, %cst_82 {dimension_numbers = #tpu.dot_dimension_numbers<[1], [0], [0], [1], [0, 0, 1, 1], [], []>} : vector<1x64xf32>, vector<64x64xf32>, vector<1x64xf32> -> vector<1x64xf32>
    %186 = arith.addf %185, %67 : vector<1x64xf32>
    %187 = math.tanh %186 : vector<1x64xf32>
    %cst_83 = arith.constant dense<0.000000e+00> : vector<1x128xf32>
    %188 = tpu.matmul %187, %68, %cst_83 {dimension_numbers = #tpu.dot_dimension_numbers<[1], [0], [0], [1], [0, 0, 1, 1], [], []>} : vector<1x64xf32>, vector<64x128xf32>, vector<1x128xf32> -> vector<1x128xf32>
    %189 = arith.addf %188, %69 : vector<1x128xf32>
    %c4 = arith.constant 4 : index
    %c0_84 = arith.constant 0 : index
    %190 = vector.load %arg3[%c4, %c0_84] : memref<16x128xf32, #tpu.memory_space<vmem>>, vector<1x128xf32>
    tpu.vector_store %arg3[%c4, %c0_84], %189 {strides = array<i32>} : memref<16x128xf32, #tpu.memory_space<vmem>>, vector<1x128xf32>,
    %191 = vector.extract_strided_slice %64 {offsets = [0, 0], sizes = [1, 64], strides = [1, 1]} : vector<8x64xf32> to vector<1x64xf32>
    %cst_85 = arith.constant dense<0.000000e+00> : vector<1x64xf32>
    %192 = tpu.matmul %184, %65, %cst_85 {dimension_numbers = #tpu.dot_dimension_numbers<[1], [0], [0], [1], [0, 0, 1, 1], [], []>} : vector<1x64xf32>, vector<64x64xf32>, vector<1x64xf32> -> vector<1x64xf32>
    %193 = arith.addf %191, %192 : vector<1x64xf32>
    %194 = math.tanh %193 : vector<1x64xf32>
    %cst_86 = arith.constant dense<0.000000e+00> : vector<1x64xf32>
    %195 = tpu.matmul %194, %66, %cst_86 {dimension_numbers = #tpu.dot_dimension_numbers<[1], [0], [0], [1], [0, 0, 1, 1], [], []>} : vector<1x64xf32>, vector<64x64xf32>, vector<1x64xf32> -> vector<1x64xf32>
    %196 = arith.addf %195, %67 : vector<1x64xf32>
    %197 = math.tanh %196 : vector<1x64xf32>
    %cst_87 = arith.constant dense<0.000000e+00> : vector<1x128xf32>
    %198 = tpu.matmul %197, %68, %cst_87 {dimension_numbers = #tpu.dot_dimension_numbers<[1], [0], [0], [1], [0, 0, 1, 1], [], []>} : vector<1x64xf32>, vector<64x128xf32>, vector<1x128xf32> -> vector<1x128xf32>
    %199 = arith.addf %198, %69 : vector<1x128xf32>
    %c3 = arith.constant 3 : index
    %c0_88 = arith.constant 0 : index
    %200 = vector.load %arg3[%c3, %c0_88] : memref<16x128xf32, #tpu.memory_space<vmem>>, vector<1x128xf32>
    tpu.vector_store %arg3[%c3, %c0_88], %199 {strides = array<i32>} : memref<16x128xf32, #tpu.memory_space<vmem>>, vector<1x128xf32>,
    %201 = vector.extract_strided_slice %64 {offsets = [1, 0], sizes = [1, 64], strides = [1, 1]} : vector<8x64xf32> to vector<1x64xf32>
    %cst_89 = arith.constant dense<0.000000e+00> : vector<1x64xf32>
    %202 = tpu.matmul %194, %65, %cst_89 {dimension_numbers = #tpu.dot_dimension_numbers<[1], [0], [0], [1], [0, 0, 1, 1], [], []>} : vector<1x64xf32>, vector<64x64xf32>, vector<1x64xf32> -> vector<1x64xf32>
    %203 = arith.addf %201, %202 : vector<1x64xf32>
    %204 = math.tanh %203 : vector<1x64xf32>
    %cst_90 = arith.constant dense<0.000000e+00> : vector<1x64xf32>
    %205 = tpu.matmul %204, %66, %cst_90 {dimension_numbers = #tpu.dot_dimension_numbers<[1], [0], [0], [1], [0, 0, 1, 1], [], []>} : vector<1x64xf32>, vector<64x64xf32>, vector<1x64xf32> -> vector<1x64xf32>
    %206 = arith.addf %205, %67 : vector<1x64xf32>
    %207 = math.tanh %206 : vector<1x64xf32>
    %cst_91 = arith.constant dense<0.000000e+00> : vector<1x128xf32>
    %208 = tpu.matmul %207, %68, %cst_91 {dimension_numbers = #tpu.dot_dimension_numbers<[1], [0], [0], [1], [0, 0, 1, 1], [], []>} : vector<1x64xf32>, vector<64x128xf32>, vector<1x128xf32> -> vector<1x128xf32>
    %209 = arith.addf %208, %69 : vector<1x128xf32>
    %c2 = arith.constant 2 : index
    %c0_92 = arith.constant 0 : index
    %210 = vector.load %arg3[%c2, %c0_92] : memref<16x128xf32, #tpu.memory_space<vmem>>, vector<1x128xf32>
    tpu.vector_store %arg3[%c2, %c0_92], %209 {strides = array<i32>} : memref<16x128xf32, #tpu.memory_space<vmem>>, vector<1x128xf32>,
    %211 = vector.extract_strided_slice %64 {offsets = [0, 0], sizes = [1, 64], strides = [1, 1]} : vector<8x64xf32> to vector<1x64xf32>
    %cst_93 = arith.constant dense<0.000000e+00> : vector<1x64xf32>
    %212 = tpu.matmul %204, %65, %cst_93 {dimension_numbers = #tpu.dot_dimension_numbers<[1], [0], [0], [1], [0, 0, 1, 1], [], []>} : vector<1x64xf32>, vector<64x64xf32>, vector<1x64xf32> -> vector<1x64xf32>
    %213 = arith.addf %211, %212 : vector<1x64xf32>
    %214 = math.tanh %213 : vector<1x64xf32>
    %cst_94 = arith.constant dense<0.000000e+00> : vector<1x64xf32>
    %215 = tpu.matmul %214, %66, %cst_94 {dimension_numbers = #tpu.dot_dimension_numbers<[1], [0], [0], [1], [0, 0, 1, 1], [], []>} : vector<1x64xf32>, vector<64x64xf32>, vector<1x64xf32> -> vector<1x64xf32>
    %216 = arith.addf %215, %67 : vector<1x64xf32>
    %217 = math.tanh %216 : vector<1x64xf32>
    %cst_95 = arith.constant dense<0.000000e+00> : vector<1x128xf32>
    %218 = tpu.matmul %217, %68, %cst_95 {dimension_numbers = #tpu.dot_dimension_numbers<[1], [0], [0], [1], [0, 0, 1, 1], [], []>} : vector<1x64xf32>, vector<64x128xf32>, vector<1x128xf32> -> vector<1x128xf32>
    %219 = arith.addf %218, %69 : vector<1x128xf32>
    %c1 = arith.constant 1 : index
    %c0_96 = arith.constant 0 : index
    %220 = vector.load %arg3[%c1, %c0_96] : memref<16x128xf32, #tpu.memory_space<vmem>>, vector<1x128xf32>
    tpu.vector_store %arg3[%c1, %c0_96], %219 {strides = array<i32>} : memref<16x128xf32, #tpu.memory_space<vmem>>, vector<1x128xf32>,
    %221 = vector.extract_strided_slice %64 {offsets = [1, 0], sizes = [1, 64], strides = [1, 1]} : vector<8x64xf32> to vector<1x64xf32>
    %cst_97 = arith.constant dense<0.000000e+00> : vector<1x64xf32>
    %222 = tpu.matmul %214, %65, %cst_97 {dimension_numbers = #tpu.dot_dimension_numbers<[1], [0], [0], [1], [0, 0, 1, 1], [], []>} : vector<1x64xf32>, vector<64x64xf32>, vector<1x64xf32> -> vector<1x64xf32>
    %223 = arith.addf %221, %222 : vector<1x64xf32>
    %224 = math.tanh %223 : vector<1x64xf32>
    %cst_98 = arith.constant dense<0.000000e+00> : vector<1x64xf32>
    %225 = tpu.matmul %224, %66, %cst_98 {dimension_numbers = #tpu.dot_dimension_numbers<[1], [0], [0], [1], [0, 0, 1, 1], [], []>} : vector<1x64xf32>, vector<64x64xf32>, vector<1x64xf32> -> vector<1x64xf32>
    %226 = arith.addf %225, %67 : vector<1x64xf32>
    %227 = math.tanh %226 : vector<1x64xf32>
    %cst_99 = arith.constant dense<0.000000e+00> : vector<1x128xf32>
    %228 = tpu.matmul %227, %68, %cst_99 {dimension_numbers = #tpu.dot_dimension_numbers<[1], [0], [0], [1], [0, 0, 1, 1], [], []>} : vector<1x64xf32>, vector<64x128xf32>, vector<1x128xf32> -> vector<1x128xf32>
    %229 = arith.addf %228, %69 : vector<1x128xf32>
    %c0_100 = arith.constant 0 : index
    %c0_101 = arith.constant 0 : index
    %230 = vector.load %arg3[%c0_100, %c0_101] : memref<16x128xf32, #tpu.memory_space<vmem>>, vector<1x128xf32>
    tpu.vector_store %arg3[%c0_100, %c0_101], %229 {strides = array<i32>} : memref<16x128xf32, #tpu.memory_space<vmem>>, vector<1x128xf32>,
    return
  }
}

</mosaic_0001>

<llo_original>
// kernel: forward.1
$region0: #{forward.1}
  #allocation0 [shape = 'u32[]', space=smem, size = 0x4, offset = 0x4, fixed_abs, tag = 'smem constant byte address 0x4 - core index']
  #allocation1 [shape = 'u32[72,128]{1,0:T(1,128)}', space=vmem, size = 0x9000, scoped, tag = 'internal scratch']
  %s0 = inlined_call_operand.vmem [shape: f32[128,64], index: 0, kind: input, shape index: {}]
  %s1 = inlined_call_operand.vmem [shape: f32[416,64], index: 1, kind: input, shape index: {}]
  %s2 = inlined_call_operand.vmem [shape: f32[144,128], index: 2, kind: input, shape index: {}]
  %s3 = inlined_call_operand.vmem [shape: f32[16,128], index: 3, kind: output, shape index: {0}]
  %s4 = inlined_call_operand.vmem [shape: f32[64,128], index: 4, kind: output, shape index: {1}]
  %5 = xla_tuple %s3, %s4
  %s6 = sld [smem:[#allocation0]]
  $region30: #{forward.1} parent=0
    _
  %s8 = ssub.s32 1, %s6
  %s9 = scalar_select 0, %s8, %s6
  // Predicated region
  $region2: #{forward.1} parent=0 // pred_check
    _
  $region3: #{forward.1} parent=0 // pred_check_branch
    %11 = sbr.rel (0) target = $region5
  $region4: #{forward.1} parent=0 // pred_region
    _
  $region5: #{forward.1} parent=0 // pred_fallthru
    _
  // Predicated region
  $region6: #{forward.1} parent=0 // pred_check
    _
  $region7: #{forward.1} parent=0 // pred_check_branch
    %13 = sbr.rel (0) target = $region9
  $region8: #{forward.1} parent=0 // pred_region
    _
  $region9: #{forward.1} parent=0 // pred_fallthru
    _
  // Predicated region
  $region10: #{forward.1} parent=0 // pred_check
    _
  $region11: #{forward.1} parent=0 // pred_check_branch
    %15 = sbr.rel (0) target = $region13
  $region12: #{forward.1} parent=0 // pred_region
    _
  $region13: #{forward.1} parent=0 // pred_fallthru
    _
  %v16 = vld [vmem:[%s0] sm:$0xff]
  %v17 = vld [vmem:[%s0 + $0x8] sm:$0xff]
  %v18 = vld [vmem:[%s0 + $0x10] sm:$0xff]
  %v19 = vld [vmem:[%s0 + $0x18] sm:$0xff]
  %v20 = vld [vmem:[%s0 + $0x20] sm:$0xff]
  %v21 = vld [vmem:[%s0 + $0x28] sm:$0xff]
  %v22 = vld [vmem:[%s0 + $0x30] sm:$0xff]
  %v23 = vld [vmem:[%s0 + $0x38] sm:$0xff]
  %v24 = vld [vmem:[%s0 + $0x40] sm:$0xff]
  %v25 = vld [vmem:[%s0 + $0x48] sm:$0xff]
  %v26 = vld [vmem:[%s0 + $0x50] sm:$0xff]
  %v27 = vld [vmem:[%s0 + $0x58] sm:$0xff]
  %v28 = vld [vmem:[%s0 + $0x60] sm:$0xff]
  %v29 = vld [vmem:[%s0 + $0x68] sm:$0xff]
  %v30 = vld [vmem:[%s0 + $0x70] sm:$0xff]
  %v31 = vld [vmem:[%s0 + $0x78] sm:$0xff]
  %v32 = vld [vmem:[%s1] sm:$0xff]
  %v33 = vld [vmem:[%s1 + $0x8] sm:$0xff]
  %v34 = vld [vmem:[%s1 + $0x10] sm:$0xff]
  %v35 = vld [vmem:[%s1 + $0x18] sm:$0xff]
  %v36 = vld [vmem:[%s1 + $0x20] sm:$0xff]
  %v37 = vld [vmem:[%s1 + $0x28] sm:$0xff]
  %v38 = vld [vmem:[%s1 + $0x30] sm:$0xff]
  %v39 = vld [vmem:[%s1 + $0x38] sm:$0xff]
  %v40 = vld [vmem:[%s1 + $0x180] sm:$0x1]
  %v41 = vperm.slane %v40, 0
  %vm42 = vcmask 523264
  %v44 = vsel %vm42, %v16, 0
  %v47 = vsel %vm42, %v17, 0
  %v50 = vsel %vm42, %v18, 0
  %v53 = vsel %vm42, %v19, 0
  %v56 = vsel %vm42, %v20, 0
  %v59 = vsel %vm42, %v21, 0
  %v62 = vsel %vm42, %v22, 0
  %v65 = vsel %vm42, %v23, 0
  %67 = vmatpush.msra.mxu0 0.0
  %68 = vmatpush.msra.mxu0 0.0
  %69 = vmatpush.msra.mxu0 0.0
  %70 = vmatpush.msra.mxu0 0.0
  %71 = vmatpush.msra.mxu0 0.0
  %72 = vmatpush.msra.mxu0 0.0
  %73 = vmatpush.msra.mxu0 0.0
  %74 = vmatpush.msra.mxu0 0.0
  %75 = vmatpush.msra.mxu0 %v39
  %76 = vmatpush.msra.mxu0 %v38
  %77 = vmatpush.msra.mxu0 %v37
  %78 = vmatpush.msra.mxu0 %v36
  %79 = vmatpush.msra.mxu0 %v35
  %80 = vmatpush.msra.mxu0 %v34
  %81 = vmatpush.msra.mxu0 %v33
  %82 = vmatpush.msra.mxu0 %v32
  %83 = vmatmul.f32.gmra.mxu0 %v44
  %v84 = vpop.f32.mrf.mxu0
  %v85 = vadd.f32 %v41, %v84
  %86 = vmatmul.f32.gmra.mxu0 %v47
  %v87 = vpop.f32.mrf.mxu0
  %v88 = vadd.f32 %v41, %v87
  %89 = vmatmul.f32.gmra.mxu0 %v50
  %v90 = vpop.f32.mrf.mxu0
  %v91 = vadd.f32 %v41, %v90
  %92 = vmatmul.f32.gmra.mxu0 %v53
  %v93 = vpop.f32.mrf.mxu0
  %v94 = vadd.f32 %v41, %v93
  %95 = vmatmul.f32.gmra.mxu0 %v56
  %v96 = vpop.f32.mrf.mxu0
  %v97 = vadd.f32 %v41, %v96
  %98 = vmatmul.f32.gmra.mxu0 %v59
  %v99 = vpop.f32.mrf.mxu0
  %v100 = vadd.f32 %v41, %v99
  %101 = vmatmul.f32.gmra.mxu0 %v62
  %v102 = vpop.f32.mrf.mxu0
  %v103 = vadd.f32 %v41, %v102
  %104 = vmatmul.f32.gmra.mxu0 %v65
  %v105 = vpop.f32.mrf.mxu0
  %v106 = vadd.f32 %v41, %v105
  %107 = vdwg.mxu0
  %v108 = vtanh.pop %v85
  %v109 = vtanh.pop %v88
  %v110 = vtanh.pop %v91
  %v111 = vtanh.pop %v94
  %v112 = vtanh.pop %v97
  %v113 = vtanh.pop %v100
  %v114 = vtanh.pop %v103
  %v115 = vtanh.pop %v106
  %v116 = vld [vmem:[%s2] sm:$0xff]
  %v117 = vld [vmem:[%s2 + $0x8] sm:$0xff]
  %v118 = vld [vmem:[%s2 + $0x10] sm:$0xff]
  %v119 = vld [vmem:[%s2 + $0x18] sm:$0xff]
  %v120 = vld [vmem:[%s2 + $0x20] sm:$0xff]
  %v121 = vld [vmem:[%s2 + $0x28] sm:$0xff]
  %v122 = vld [vmem:[%s2 + $0x30] sm:$0xff]
  %v123 = vld [vmem:[%s2 + $0x38] sm:$0xff]
  %v124 = vld [vmem:[%s2 + $0x80] sm:$0x1]
  %v125 = vperm.slane %v124, 0
  %v127 = vsel %vm42, %v108, 0
  %v130 = vsel %vm42, %v109, 0
  %v133 = vsel %vm42, %v110, 0
  %v136 = vsel %vm42, %v111, 0
  %v139 = vsel %vm42, %v112, 0
  %v142 = vsel %vm42, %v113, 0
  %v145 = vsel %vm42, %v114, 0
  %v148 = vsel %vm42, %v115, 0
  %150 = vmatpush.msra.mxu0 0.0
  %151 = vmatpush.msra.mxu0 0.0
  %152 = vmatpush.msra.mxu0 0.0
  %153 = vmatpush.msra.mxu0 0.0
  %154 = vmatpush.msra.mxu0 0.0
  %155 = vmatpush.msra.mxu0 0.0
  %156 = vmatpush.msra.mxu0 0.0
  %157 = vmatpush.msra.mxu0 0.0
  %158 = vmatpush.msra.mxu0 %v123
  %159 = vmatpush.msra.mxu0 %v122
  %160 = vmatpush.msra.mxu0 %v121
  %161 = vmatpush.msra.mxu0 %v120
  %162 = vmatpush.msra.mxu0 %v119
  %163 = vmatpush.msra.mxu0 %v118
  %164 = vmatpush.msra.mxu0 %v117
  %165 = vmatpush.msra.mxu0 %v116
  %166 = vmatmul.f32.gmra.mxu0 %v127
  %v167 = vpop.f32.mrf.mxu0
  %v168 = vadd.f32 %v125, %v167
  %169 = vmatmul.f32.gmra.mxu0 %v130
  %v170 = vpop.f32.mrf.mxu0
  %v171 = vadd.f32 %v125, %v170
  %172 = vmatmul.f32.gmra.mxu0 %v133
  %v173 = vpop.f32.mrf.mxu0
  %v174 = vadd.f32 %v125, %v173
  %175 = vmatmul.f32.gmra.mxu0 %v136
  %v176 = vpop.f32.mrf.mxu0
  %v177 = vadd.f32 %v125, %v176
  %178 = vmatmul.f32.gmra.mxu0 %v139
  %v179 = vpop.f32.mrf.mxu0
  %v180 = vadd.f32 %v125, %v179
  %181 = vmatmul.f32.gmra.mxu0 %v142
  %v182 = vpop.f32.mrf.mxu0
  %v183 = vadd.f32 %v125, %v182
  %184 = vmatmul.f32.gmra.mxu0 %v145
  %v185 = vpop.f32.mrf.mxu0
  %v186 = vadd.f32 %v125, %v185
  %187 = vmatmul.f32.gmra.mxu0 %v148
  %v188 = vpop.f32.mrf.mxu0
  %v189 = vadd.f32 %v125, %v188
  %190 = vdwg.mxu0
  %191 = vst [vmem:[%s4] sm:$0xff] %v168
  %192 = vst [vmem:[%s4 + $0x8] sm:$0xff] %v171
  %193 = vst [vmem:[%s4 + $0x10] sm:$0xff] %v174
  %194 = vst [vmem:[%s4 + $0x18] sm:$0xff] %v177
  %195 = vst [vmem:[%s4 + $0x20] sm:$0xff] %v180
  %196 = vst [vmem:[%s4 + $0x28] sm:$0xff] %v183
  %197 = vst [vmem:[%s4 + $0x30] sm:$0xff] %v186
  %198 = vst [vmem:[%s4 + $0x38] sm:$0xff] %v189
  %v199 = vmul.f32 %v168, 0.5
  %v200 = vmul.f32 %v171, 0.5
  %v201 = vmul.f32 %v174, 0.5
  %v202 = vmul.f32 %v177, 0.5
  %v203 = vmul.f32 %v180, 0.5
  %v204 = vmul.f32 %v183, 0.5
  %v205 = vmul.f32 %v186, 0.5
  %v206 = vmul.f32 %v189, 0.5
  %v207 = vmul.f32 %v199, 1.442695
  %v208 = vpow.pop %v207
  %v209 = vmul.f32 %v200, 1.442695
  %v210 = vpow.pop %v209
  %v211 = vmul.f32 %v201, 1.442695
  %v212 = vpow.pop %v211
  %v213 = vmul.f32 %v202, 1.442695
  %v214 = vpow.pop %v213
  %v215 = vmul.f32 %v203, 1.442695
  %v216 = vpow.pop %v215
  %v217 = vmul.f32 %v204, 1.442695
  %v218 = vpow.pop %v217
  %v219 = vmul.f32 %v205, 1.442695
  %v220 = vpow.pop %v219
  %v221 = vmul.f32 %v206, 1.442695
  %v222 = vpow.pop %v221
  %231 = vrot.lane.b32.xlu0 %v24, 64
  %v232 = vpop.permute.xlu0 %231
  %233 = vrot.lane.b32.xlu0 %v25, 64
  %v234 = vpop.permute.xlu0 %233
  %235 = vrot.lane.b32.xlu0 %v26, 64
  %v236 = vpop.permute.xlu0 %235
  %237 = vrot.lane.b32.xlu0 %v27, 64
  %v238 = vpop.permute.xlu0 %237
  %239 = vrot.lane.b32.xlu0 %v28, 64
  %v240 = vpop.permute.xlu0 %239
  %241 = vrot.lane.b32.xlu0 %v29, 64
  %v242 = vpop.permute.xlu0 %241
  %243 = vrot.lane.b32.xlu0 %v30, 64
  %v244 = vpop.permute.xlu0 %243
  %245 = vrot.lane.b32.xlu0 %v31, 64
  %v246 = vpop.permute.xlu0 %245
  %v255 = vmul.f32 %v208, %v232
  %v256 = vmul.f32 %v210, %v234
  %v257 = vmul.f32 %v212, %v236
  %v258 = vmul.f32 %v214, %v238
  %v259 = vmul.f32 %v216, %v240
  %v260 = vmul.f32 %v218, %v242
  %v261 = vmul.f32 %v220, %v244
  %v262 = vmul.f32 %v222, %v246
  %271 = vrot.lane.b32.xlu0 %v255, 64
  %v272 = vpop.permute.xlu0 %271
  %273 = vrot.lane.b32.xlu0 %v256, 64
  %v274 = vpop.permute.xlu0 %273
  %275 = vrot.lane.b32.xlu0 %v257, 64
  %v276 = vpop.permute.xlu0 %275
  %277 = vrot.lane.b32.xlu0 %v258, 64
  %v278 = vpop.permute.xlu0 %277
  %279 = vrot.lane.b32.xlu0 %v259, 64
  %v280 = vpop.permute.xlu0 %279
  %281 = vrot.lane.b32.xlu0 %v260, 64
  %v282 = vpop.permute.xlu0 %281
  %283 = vrot.lane.b32.xlu0 %v261, 64
  %v284 = vpop.permute.xlu0 %283
  %285 = vrot.lane.b32.xlu0 %v262, 64
  %v286 = vpop.permute.xlu0 %285
  %v295 = vadd.f32 %v168, %v272
  %v296 = vadd.f32 %v171, %v274
  %v297 = vadd.f32 %v174, %v276
  %v298 = vadd.f32 %v177, %v278
  %v299 = vadd.f32 %v180, %v280
  %v300 = vadd.f32 %v183, %v282
  %v301 = vadd.f32 %v186, %v284
  %v302 = vadd.f32 %v189, %v286
  %v303 = vld [vmem:[%s1 + $0x40] sm:$0xff]
  %v304 = vld [vmem:[%s1 + $0x48] sm:$0xff]
  %v305 = vld [vmem:[%s1 + $0x50] sm:$0xff]
  %v306 = vld [vmem:[%s1 + $0x58] sm:$0xff]
  %v307 = vld [vmem:[%s1 + $0x60] sm:$0xff]
  %v308 = vld [vmem:[%s1 + $0x68] sm:$0xff]
  %v309 = vld [vmem:[%s1 + $0x70] sm:$0xff]
  %v310 = vld [vmem:[%s1 + $0x78] sm:$0xff]
  %v311 = vld [vmem:[%s1 + $0x188] sm:$0x1]
  %v312 = vperm.slane %v311, 0
  %v314 = vsel %vm42, %v295, 0
  %v317 = vsel %vm42, %v296, 0
  %v320 = vsel %vm42, %v297, 0
  %v323 = vsel %vm42, %v298, 0
  %v326 = vsel %vm42, %v299, 0
  %v329 = vsel %vm42, %v300, 0
  %v332 = vsel %vm42, %v301, 0
  %v335 = vsel %vm42, %v302, 0
  %337 = vmatpush.msra.mxu0 0.0
  %338 = vmatpush.msra.mxu0 0.0
  %339 = vmatpush.msra.mxu0 0.0
  %340 = vmatpush.msra.mxu0 0.0
  %341 = vmatpush.msra.mxu0 0.0
  %342 = vmatpush.msra.mxu0 0.0
  %343 = vmatpush.msra.mxu0 0.0
  %344 = vmatpush.msra.mxu0 0.0
  %345 = vmatpush.msra.mxu0 %v310
  %346 = vmatpush.msra.mxu0 %v309
  %347 = vmatpush.msra.mxu0 %v308
  %348 = vmatpush.msra.mxu0 %v307
  %349 = vmatpush.msra.mxu0 %v306
  %350 = vmatpush.msra.mxu0 %v305
  %351 = vmatpush.msra.mxu0 %v304
  %352 = vmatpush.msra.mxu0 %v303
  %353 = vmatmul.f32.gmra.mxu0 %v314
  %v354 = vpop.f32.mrf.mxu0
  %v355 = vadd.f32 %v312, %v354
  %356 = vmatmul.f32.gmra.mxu0 %v317
  %v357 = vpop.f32.mrf.mxu0
  %v358 = vadd.f32 %v312, %v357
  %359 = vmatmul.f32.gmra.mxu0 %v320
  %v360 = vpop.f32.mrf.mxu0
  %v361 = vadd.f32 %v312, %v360
  %362 = vmatmul.f32.gmra.mxu0 %v323
  %v363 = vpop.f32.mrf.mxu0
  %v364 = vadd.f32 %v312, %v363
  %365 = vmatmul.f32.gmra.mxu0 %v326
  %v366 = vpop.f32.mrf.mxu0
  %v367 = vadd.f32 %v312, %v366
  %368 = vmatmul.f32.gmra.mxu0 %v329
  %v369 = vpop.f32.mrf.mxu0
  %v370 = vadd.f32 %v312, %v369
  %371 = vmatmul.f32.gmra.mxu0 %v332
  %v372 = vpop.f32.mrf.mxu0
  %v373 = vadd.f32 %v312, %v372
  %374 = vmatmul.f32.gmra.mxu0 %v335
  %v375 = vpop.f32.mrf.mxu0
  %v376 = vadd.f32 %v312, %v375
  %377 = vdwg.mxu0
  %v378 = vld [vmem:[%s1 + $0x80] sm:$0xff]
  %v379 = vld [vmem:[%s1 + $0x88] sm:$0xff]
  %v380 = vld [vmem:[%s1 + $0x90] sm:$0xff]
  %v381 = vld [vmem:[%s1 + $0x98] sm:$0xff]
  %v382 = vld [vmem:[%s1 + $0xa0] sm:$0xff]
  %v383 = vld [vmem:[%s1 + $0xa8] sm:$0xff]
  %v384 = vld [vmem:[%s1 + $0xb0] sm:$0xff]
  %v385 = vld [vmem:[%s1 + $0xb8] sm:$0xff]
  %v387 = vsel %vm42, 0.0, 0
  %389 = vmatpush.msra.mxu0 0.0
  %390 = vmatpush.msra.mxu0 0.0
  %391 = vmatpush.msra.mxu0 0.0
  %392 = vmatpush.msra.mxu0 0.0
  %393 = vmatpush.msra.mxu0 0.0
  %394 = vmatpush.msra.mxu0 0.0
  %395 = vmatpush.msra.mxu0 0.0
  %396 = vmatpush.msra.mxu0 0.0
  %397 = vmatpush.msra.mxu0 %v385
  %398 = vmatpush.msra.mxu0 %v384
  %399 = vmatpush.msra.mxu0 %v383
  %400 = vmatpush.msra.mxu0 %v382
  %401 = vmatpush.msra.mxu0 %v381
  %402 = vmatpush.msra.mxu0 %v380
  %403 = vmatpush.msra.mxu0 %v379
  %404 = vmatpush.msra.mxu0 %v378
  %405 = vmatmul.f32.gmra.mxu0 %v387
  %v406 = vpop.f32.mrf.mxu0
  %v407 = vadd.f32 0.0, %v406
  %408 = vdwg.mxu0
  %v409 = vadd.f32 %v355, %v407
  %v410 = vtanh.pop %v409
  %v412 = vsel %vm42, %v410, 0
  %414 = vmatpush.msra.mxu0 0.0
  %415 = vmatpush.msra.mxu0 0.0
  %416 = vmatpush.msra.mxu0 0.0
  %417 = vmatpush.msra.mxu0 0.0
  %418 = vmatpush.msra.mxu0 0.0
  %419 = vmatpush.msra.mxu0 0.0
  %420 = vmatpush.msra.mxu0 0.0
  %421 = vmatpush.msra.mxu0 0.0
  %422 = vmatpush.msra.mxu0 %v385
  %423 = vmatpush.msra.mxu0 %v384
  %424 = vmatpush.msra.mxu0 %v383
  %425 = vmatpush.msra.mxu0 %v382
  %426 = vmatpush.msra.mxu0 %v381
  %427 = vmatpush.msra.mxu0 %v380
  %428 = vmatpush.msra.mxu0 %v379
  %429 = vmatpush.msra.mxu0 %v378
  %430 = vmatmul.f32.gmra.mxu0 %v412
  %v431 = vpop.f32.mrf.mxu0
  %v432 = vadd.f32 0.0, %v431
  %433 = vdwg.mxu0
  %v434 = vadd.f32 %v358, %v432
  %v435 = vtanh.pop %v434
  %v437 = vsel %vm42, %v435, 0
  %439 = vmatpush.msra.mxu0 0.0
  %440 = vmatpush.msra.mxu0 0.0
  %441 = vmatpush.msra.mxu0 0.0
  %442 = vmatpush.msra.mxu0 0.0
  %443 = vmatpush.msra.mxu0 0.0
  %444 = vmatpush.msra.mxu0 0.0
  %445 = vmatpush.msra.mxu0 0.0
  %446 = vmatpush.msra.mxu0 0.0
  %447 = vmatpush.msra.mxu0 %v385
  %448 = vmatpush.msra.mxu0 %v384
  %449 = vmatpush.msra.mxu0 %v383
  %450 = vmatpush.msra.mxu0 %v382
  %451 = vmatpush.msra.mxu0 %v381
  %452 = vmatpush.msra.mxu0 %v380
  %453 = vmatpush.msra.mxu0 %v379
  %454 = vmatpush.msra.mxu0 %v378
  %455 = vmatmul.f32.gmra.mxu0 %v437
  %v456 = vpop.f32.mrf.mxu0
  %v457 = vadd.f32 0.0, %v456
  %458 = vdwg.mxu0
  %v459 = vadd.f32 %v361, %v457
  %v460 = vtanh.pop %v459
  %v462 = vsel %vm42, %v460, 0
  %464 = vmatpush.msra.mxu0 0.0
  %465 = vmatpush.msra.mxu0 0.0
  %466 = vmatpush.msra.mxu0 0.0
  %467 = vmatpush.msra.mxu0 0.0
  %468 = vmatpush.msra.mxu0 0.0
  %469 = vmatpush.msra.mxu0 0.0
  %470 = vmatpush.msra.mxu0 0.0
  %471 = vmatpush.msra.mxu0 0.0
  %472 = vmatpush.msra.mxu0 %v385
  %473 = vmatpush.msra.mxu0 %v384
  %474 = vmatpush.msra.mxu0 %v383
  %475 = vmatpush.msra.mxu0 %v382
  %476 = vmatpush.msra.mxu0 %v381
  %477 = vmatpush.msra.mxu0 %v380
  %478 = vmatpush.msra.mxu0 %v379
  %479 = vmatpush.msra.mxu0 %v378
  %480 = vmatmul.f32.gmra.mxu0 %v462
  %v481 = vpop.f32.mrf.mxu0
  %v482 = vadd.f32 0.0, %v481
  %483 = vdwg.mxu0
  %v484 = vadd.f32 %v364, %v482
  %v485 = vtanh.pop %v484
  %v487 = vsel %vm42, %v485, 0
  %489 = vmatpush.msra.mxu0 0.0
  %490 = vmatpush.msra.mxu0 0.0
  %491 = vmatpush.msra.mxu0 0.0
  %492 = vmatpush.msra.mxu0 0.0
  %493 = vmatpush.msra.mxu0 0.0
  %494 = vmatpush.msra.mxu0 0.0
  %495 = vmatpush.msra.mxu0 0.0
  %496 = vmatpush.msra.mxu0 0.0
  %497 = vmatpush.msra.mxu0 %v385
  %498 = vmatpush.msra.mxu0 %v384
  %499 = vmatpush.msra.mxu0 %v383
  %500 = vmatpush.msra.mxu0 %v382
  %501 = vmatpush.msra.mxu0 %v381
  %502 = vmatpush.msra.mxu0 %v380
  %503 = vmatpush.msra.mxu0 %v379
  %504 = vmatpush.msra.mxu0 %v378
  %505 = vmatmul.f32.gmra.mxu0 %v487
  %v506 = vpop.f32.mrf.mxu0
  %v507 = vadd.f32 0.0, %v506
  %508 = vdwg.mxu0
  %v509 = vadd.f32 %v367, %v507
  %v510 = vtanh.pop %v509
  %v512 = vsel %vm42, %v510, 0
  %514 = vmatpush.msra.mxu0 0.0
  %515 = vmatpush.msra.mxu0 0.0
  %516 = vmatpush.msra.mxu0 0.0
  %517 = vmatpush.msra.mxu0 0.0
  %518 = vmatpush.msra.mxu0 0.0
  %519 = vmatpush.msra.mxu0 0.0
  %520 = vmatpush.msra.mxu0 0.0
  %521 = vmatpush.msra.mxu0 0.0
  %522 = vmatpush.msra.mxu0 %v385
  %523 = vmatpush.msra.mxu0 %v384
  %524 = vmatpush.msra.mxu0 %v383
  %525 = vmatpush.msra.mxu0 %v382
  %526 = vmatpush.msra.mxu0 %v381
  %527 = vmatpush.msra.mxu0 %v380
  %528 = vmatpush.msra.mxu0 %v379
  %529 = vmatpush.msra.mxu0 %v378
  %530 = vmatmul.f32.gmra.mxu0 %v512
  %v531 = vpop.f32.mrf.mxu0
  %v532 = vadd.f32 0.0, %v531
  %533 = vdwg.mxu0
  %v534 = vadd.f32 %v370, %v532
  %v535 = vtanh.pop %v534
  %v537 = vsel %vm42, %v535, 0
  %539 = vmatpush.msra.mxu0 0.0
  %540 = vmatpush.msra.mxu0 0.0
  %541 = vmatpush.msra.mxu0 0.0
  %542 = vmatpush.msra.mxu0 0.0
  %543 = vmatpush.msra.mxu0 0.0
  %544 = vmatpush.msra.mxu0 0.0
  %545 = vmatpush.msra.mxu0 0.0
  %546 = vmatpush.msra.mxu0 0.0
  %547 = vmatpush.msra.mxu0 %v385
  %548 = vmatpush.msra.mxu0 %v384
  %549 = vmatpush.msra.mxu0 %v383
  %550 = vmatpush.msra.mxu0 %v382
  %551 = vmatpush.msra.mxu0 %v381
  %552 = vmatpush.msra.mxu0 %v380
  %553 = vmatpush.msra.mxu0 %v379
  %554 = vmatpush.msra.mxu0 %v378
  %555 = vmatmul.f32.gmra.mxu0 %v537
  %v556 = vpop.f32.mrf.mxu0
  %v557 = vadd.f32 0.0, %v556
  %558 = vdwg.mxu0
  %v559 = vadd.f32 %v373, %v557
  %v560 = vtanh.pop %v559
  %v562 = vsel %vm42, %v560, 0
  %564 = vmatpush.msra.mxu0 0.0
  %565 = vmatpush.msra.mxu0 0.0
  %566 = vmatpush.msra.mxu0 0.0
  %567 = vmatpush.msra.mxu0 0.0
  %568 = vmatpush.msra.mxu0 0.0
  %569 = vmatpush.msra.mxu0 0.0
  %570 = vmatpush.msra.mxu0 0.0
  %571 = vmatpush.msra.mxu0 0.0
  %572 = vmatpush.msra.mxu0 %v385
  %573 = vmatpush.msra.mxu0 %v384
  %574 = vmatpush.msra.mxu0 %v383
  %575 = vmatpush.msra.mxu0 %v382
  %576 = vmatpush.msra.mxu0 %v381
  %577 = vmatpush.msra.mxu0 %v380
  %578 = vmatpush.msra.mxu0 %v379
  %579 = vmatpush.msra.mxu0 %v378
  %580 = vmatmul.f32.gmra.mxu0 %v562
  %v581 = vpop.f32.mrf.mxu0
  %v582 = vadd.f32 0.0, %v581
  %583 = vdwg.mxu0
  %v584 = vadd.f32 %v376, %v582
  %v585 = vtanh.pop %v584
  %v586 = vld [vmem:[%s1 + $0xc0] sm:$0xff]
  %v587 = vld [vmem:[%s1 + $0xc8] sm:$0xff]
  %v588 = vld [vmem:[%s1 + $0xd0] sm:$0xff]
  %v589 = vld [vmem:[%s1 + $0xd8] sm:$0xff]
  %v590 = vld [vmem:[%s1 + $0xe0] sm:$0xff]
  %v591 = vld [vmem:[%s1 + $0xe8] sm:$0xff]
  %v592 = vld [vmem:[%s1 + $0xf0] sm:$0xff]
  %v593 = vld [vmem:[%s1 + $0xf8] sm:$0xff]
  %v594 = vld [vmem:[%s1 + $0x190] sm:$0x1]
  %v595 = vperm.slane %v594, 0
  %v597 = vsel %vm42, %v585, 0
  %599 = vmatpush.msra.mxu0 0.0
  %600 = vmatpush.msra.mxu0 0.0
  %601 = vmatpush.msra.mxu0 0.0
  %602 = vmatpush.msra.mxu0 0.0
  %603 = vmatpush.msra.mxu0 0.0
  %604 = vmatpush.msra.mxu0 0.0
  %605 = vmatpush.msra.mxu0 0.0
  %606 = vmatpush.msra.mxu0 0.0
  %607 = vmatpush.msra.mxu0 %v593
  %608 = vmatpush.msra.mxu0 %v592
  %609 = vmatpush.msra.mxu0 %v591
  %610 = vmatpush.msra.mxu0 %v590
  %611 = vmatpush.msra.mxu0 %v589
  %612 = vmatpush.msra.mxu0 %v588
  %613 = vmatpush.msra.mxu0 %v587
  %614 = vmatpush.msra.mxu0 %v586
  %615 = vmatmul.f32.gmra.mxu0 %v597
  %v616 = vpop.f32.mrf.mxu0
  %v617 = vadd.f32 %v595, %v616
  %618 = vdwg.mxu0
  %v619 = vld [vmem:[%s1 + $0x100] sm:$0xff]
  %v620 = vld [vmem:[%s1 + $0x108] sm:$0xff]
  %v621 = vld [vmem:[%s1 + $0x110] sm:$0xff]
  %v622 = vld [vmem:[%s1 + $0x118] sm:$0xff]
  %v623 = vld [vmem:[%s1 + $0x120] sm:$0xff]
  %v624 = vld [vmem:[%s1 + $0x128] sm:$0xff]
  %v625 = vld [vmem:[%s1 + $0x130] sm:$0xff]
  %v626 = vld [vmem:[%s1 + $0x138] sm:$0xff]
  %v627 = vld [vmem:[%s1 + $0x140] sm:$0xff]
  %v628 = vld [vmem:[%s1 + $0x148] sm:$0xff]
  %v629 = vld [vmem:[%s1 + $0x150] sm:$0xff]
  %v630 = vld [vmem:[%s1 + $0x158] sm:$0xff]
  %v631 = vld [vmem:[%s1 + $0x160] sm:$0xff]
  %v632 = vld [vmem:[%s1 + $0x168] sm:$0xff]
  %v633 = vld [vmem:[%s1 + $0x170] sm:$0xff]
  %v634 = vld [vmem:[%s1 + $0x178] sm:$0xff]
  %v635 = vld [vmem:[%s1 + $0x198] sm:$0x1]
  %v636 = vld [vmem:[%s2 + $0x40] sm:$0xff]
  %v637 = vld [vmem:[%s2 + $0x48] sm:$0xff]
  %v638 = vld [vmem:[%s2 + $0x50] sm:$0xff]
  %v639 = vld [vmem:[%s2 + $0x58] sm:$0xff]
  %v640 = vld [vmem:[%s2 + $0x60] sm:$0xff]
  %v641 = vld [vmem:[%s2 + $0x68] sm:$0xff]
  %v642 = vld [vmem:[%s2 + $0x70] sm:$0xff]
  %v643 = vld [vmem:[%s2 + $0x78] sm:$0xff]
  %v644 = vld [vmem:[%s2 + $0x88] sm:$0x1]
  %645 = vmatpush.msra.mxu0 0.0
  %646 = vmatpush.msra.mxu0 0.0
  %647 = vmatpush.msra.mxu0 0.0
  %648 = vmatpush.msra.mxu0 0.0
  %649 = vmatpush.msra.mxu0 0.0
  %650 = vmatpush.msra.mxu0 0.0
  %651 = vmatpush.msra.mxu0 0.0
  %652 = vmatpush.msra.mxu0 0.0
  %653 = vmatpush.msra.mxu0 %v626
  %654 = vmatpush.msra.mxu0 %v625
  %655 = vmatpush.msra.mxu0 %v624
  %656 = vmatpush.msra.mxu0 %v623
  %657 = vmatpush.msra.mxu0 %v622
  %658 = vmatpush.msra.mxu0 %v621
  %659 = vmatpush.msra.mxu0 %v620
  %660 = vmatpush.msra.mxu0 %v619
  %661 = vmatmul.f32.gmra.mxu0 %v387
  %v662 = vpop.f32.mrf.mxu0
  %v663 = vadd.f32 0.0, %v662
  %664 = vdwg.mxu0
  %v665 = vadd.f32 %v617, %v663
  %v666 = vtanh.pop %v665
  %v668 = vsel %vm42, %v666, 0
  %670 = vmatpush.msra.mxu0 0.0
  %671 = vmatpush.msra.mxu0 0.0
  %672 = vmatpush.msra.mxu0 0.0
  %673 = vmatpush.msra.mxu0 0.0
  %674 = vmatpush.msra.mxu0 0.0
  %675 = vmatpush.msra.mxu0 0.0
  %676 = vmatpush.msra.mxu0 0.0
  %677 = vmatpush.msra.mxu0 0.0
  %678 = vmatpush.msra.mxu0 %v634
  %679 = vmatpush.msra.mxu0 %v633
  %680 = vmatpush.msra.mxu0 %v632
  %681 = vmatpush.msra.mxu0 %v631
  %682 = vmatpush.msra.mxu0 %v630
  %683 = vmatpush.msra.mxu0 %v629
  %684 = vmatpush.msra.mxu0 %v628
  %685 = vmatpush.msra.mxu0 %v627
  %686 = vmatmul.f32.gmra.mxu0 %v668
  %v687 = vpop.f32.mrf.mxu0
  %v688 = vadd.f32 %v635, %v687
  %689 = vdwg.mxu0
  %v690 = vtanh.pop %v688
  %v692 = vsel %vm42, %v690, 0
  %694 = vmatpush.msra.mxu0 0.0
  %695 = vmatpush.msra.mxu0 0.0
  %696 = vmatpush.msra.mxu0 0.0
  %697 = vmatpush.msra.mxu0 0.0
  %698 = vmatpush.msra.mxu0 0.0
  %699 = vmatpush.msra.mxu0 0.0
  %700 = vmatpush.msra.mxu0 0.0
  %701 = vmatpush.msra.mxu0 0.0
  %702 = vmatpush.msra.mxu0 %v643
  %703 = vmatpush.msra.mxu0 %v642
  %704 = vmatpush.msra.mxu0 %v641
  %705 = vmatpush.msra.mxu0 %v640
  %706 = vmatpush.msra.mxu0 %v639
  %707 = vmatpush.msra.mxu0 %v638
  %708 = vmatpush.msra.mxu0 %v637
  %709 = vmatpush.msra.mxu0 %v636
  %710 = vmatmul.f32.gmra.mxu0 %v692
  %v711 = vpop.f32.mrf.mxu0
  %v712 = vadd.f32 %v644, %v711
  %713 = vdwg.mxu0
  %714 = vst [vmem:[%s3 + $0xf] sm:$0x1] %v712
  %715 = vmatpush.msra.mxu0 0.0
  %716 = vmatpush.msra.mxu0 0.0
  %717 = vmatpush.msra.mxu0 0.0
  %718 = vmatpush.msra.mxu0 0.0
  %719 = vmatpush.msra.mxu0 0.0
  %720 = vmatpush.msra.mxu0 0.0
  %721 = vmatpush.msra.mxu0 0.0
  %722 = vmatpush.msra.mxu0 0.0
  %723 = vmatpush.msra.mxu0 %v626
  %724 = vmatpush.msra.mxu0 %v625
  %725 = vmatpush.msra.mxu0 %v624
  %726 = vmatpush.msra.mxu0 %v623
  %727 = vmatpush.msra.mxu0 %v622
  %728 = vmatpush.msra.mxu0 %v621
  %729 = vmatpush.msra.mxu0 %v620
  %730 = vmatpush.msra.mxu0 %v619
  %731 = vmatmul.f32.gmra.mxu0 %v668
  %v732 = vpop.f32.mrf.mxu0
  %v733 = vadd.f32 0.0, %v732
  %734 = vdwg.mxu0
  %v736 = vrot.slane %v733, 7
  %v738 = vadd.f32 %v617, %v736
  %v739 = vtanh.pop %v738
  %v741 = vrot.slane %v739, 1
  %v742 = vsel %vm42, %v741, 0
  %744 = vmatpush.msra.mxu0 0.0
  %745 = vmatpush.msra.mxu0 0.0
  %746 = vmatpush.msra.mxu0 0.0
  %747 = vmatpush.msra.mxu0 0.0
  %748 = vmatpush.msra.mxu0 0.0
  %749 = vmatpush.msra.mxu0 0.0
  %750 = vmatpush.msra.mxu0 0.0
  %751 = vmatpush.msra.mxu0 0.0
  %752 = vmatpush.msra.mxu0 %v634
  %753 = vmatpush.msra.mxu0 %v633
  %754 = vmatpush.msra.mxu0 %v632
  %755 = vmatpush.msra.mxu0 %v631
  %756 = vmatpush.msra.mxu0 %v630
  %757 = vmatpush.msra.mxu0 %v629
  %758 = vmatpush.msra.mxu0 %v628
  %759 = vmatpush.msra.mxu0 %v627
  %760 = vmatmul.f32.gmra.mxu0 %v742
  %v761 = vpop.f32.mrf.mxu0
  %v762 = vadd.f32 %v635, %v761
  %763 = vdwg.mxu0
  %v764 = vtanh.pop %v762
  %v766 = vsel %vm42, %v764, 0
  %768 = vmatpush.msra.mxu0 0.0
  %769 = vmatpush.msra.mxu0 0.0
  %770 = vmatpush.msra.mxu0 0.0
  %771 = vmatpush.msra.mxu0 0.0
  %772 = vmatpush.msra.mxu0 0.0
  %773 = vmatpush.msra.mxu0 0.0
  %774 = vmatpush.msra.mxu0 0.0
  %775 = vmatpush.msra.mxu0 0.0
  %776 = vmatpush.msra.mxu0 %v643
  %777 = vmatpush.msra.mxu0 %v642
  %778 = vmatpush.msra.mxu0 %v641
  %779 = vmatpush.msra.mxu0 %v640
  %780 = vmatpush.msra.mxu0 %v639
  %781 = vmatpush.msra.mxu0 %v638
  %782 = vmatpush.msra.mxu0 %v637
  %783 = vmatpush.msra.mxu0 %v636
  %784 = vmatmul.f32.gmra.mxu0 %v766
  %v785 = vpop.f32.mrf.mxu0
  %v786 = vadd.f32 %v644, %v785
  %787 = vdwg.mxu0
  %788 = vst [vmem:[%s3 + $0xe] sm:$0x1] %v786
  %789 = vmatpush.msra.mxu0 0.0
  %790 = vmatpush.msra.mxu0 0.0
  %791 = vmatpush.msra.mxu0 0.0
  %792 = vmatpush.msra.mxu0 0.0
  %793 = vmatpush.msra.mxu0 0.0
  %794 = vmatpush.msra.mxu0 0.0
  %795 = vmatpush.msra.mxu0 0.0
  %796 = vmatpush.msra.mxu0 0.0
  %797 = vmatpush.msra.mxu0 %v626
  %798 = vmatpush.msra.mxu0 %v625
  %799 = vmatpush.msra.mxu0 %v624
  %800 = vmatpush.msra.mxu0 %v623
  %801 = vmatpush.msra.mxu0 %v622
  %802 = vmatpush.msra.mxu0 %v621
  %803 = vmatpush.msra.mxu0 %v620
  %804 = vmatpush.msra.mxu0 %v619
  %805 = vmatmul.f32.gmra.mxu0 %v742
  %v806 = vpop.f32.mrf.mxu0
  %v807 = vadd.f32 0.0, %v806
  %808 = vdwg.mxu0
  %v809 = vadd.f32 %v617, %v807
  %v810 = vtanh.pop %v809
  %v812 = vsel %vm42, %v810, 0
  %814 = vmatpush.msra.mxu0 0.0
  %815 = vmatpush.msra.mxu0 0.0
  %816 = vmatpush.msra.mxu0 0.0
  %817 = vmatpush.msra.mxu0 0.0
  %818 = vmatpush.msra.mxu0 0.0
  %819 = vmatpush.msra.mxu0 0.0
  %820 = vmatpush.msra.mxu0 0.0
  %821 = vmatpush.msra.mxu0 0.0
  %822 = vmatpush.msra.mxu0 %v634
  %823 = vmatpush.msra.mxu0 %v633
  %824 = vmatpush.msra.mxu0 %v632
  %825 = vmatpush.msra.mxu0 %v631
  %826 = vmatpush.msra.mxu0 %v630
  %827 = vmatpush.msra.mxu0 %v629
  %828 = vmatpush.msra.mxu0 %v628
  %829 = vmatpush.msra.mxu0 %v627
  %830 = vmatmul.f32.gmra.mxu0 %v812
  %v831 = vpop.f32.mrf.mxu0
  %v832 = vadd.f32 %v635, %v831
  %833 = vdwg.mxu0
  %v834 = vtanh.pop %v832
  %v836 = vsel %vm42, %v834, 0
  %838 = vmatpush.msra.mxu0 0.0
  %839 = vmatpush.msra.mxu0 0.0
  %840 = vmatpush.msra.mxu0 0.0
  %841 = vmatpush.msra.mxu0 0.0
  %842 = vmatpush.msra.mxu0 0.0
  %843 = vmatpush.msra.mxu0 0.0
  %844 = vmatpush.msra.mxu0 0.0
  %845 = vmatpush.msra.mxu0 0.0
  %846 = vmatpush.msra.mxu0 %v643
  %847 = vmatpush.msra.mxu0 %v642
  %848 = vmatpush.msra.mxu0 %v641
  %849 = vmatpush.msra.mxu0 %v640
  %850 = vmatpush.msra.mxu0 %v639
  %851 = vmatpush.msra.mxu0 %v638
  %852 = vmatpush.msra.mxu0 %v637
  %853 = vmatpush.msra.mxu0 %v636
  %854 = vmatmul.f32.gmra.mxu0 %v836
  %v855 = vpop.f32.mrf.mxu0
  %v856 = vadd.f32 %v644, %v855
  %857 = vdwg.mxu0
  %858 = vst [vmem:[%s3 + $0xd] sm:$0x1] %v856
  %859 = vmatpush.msra.mxu0 0.0
  %860 = vmatpush.msra.mxu0 0.0
  %861 = vmatpush.msra.mxu0 0.0
  %862 = vmatpush.msra.mxu0 0.0
  %863 = vmatpush.msra.mxu0 0.0
  %864 = vmatpush.msra.mxu0 0.0
  %865 = vmatpush.msra.mxu0 0.0
  %866 = vmatpush.msra.mxu0 0.0
  %867 = vmatpush.msra.mxu0 %v626
  %868 = vmatpush.msra.mxu0 %v625
  %869 = vmatpush.msra.mxu0 %v624
  %870 = vmatpush.msra.mxu0 %v623
  %871 = vmatpush.msra.mxu0 %v622
  %872 = vmatpush.msra.mxu0 %v621
  %873 = vmatpush.msra.mxu0 %v620
  %874 = vmatpush.msra.mxu0 %v619
  %875 = vmatmul.f32.gmra.mxu0 %v812
  %v876 = vpop.f32.mrf.mxu0
  %v877 = vadd.f32 0.0, %v876
  %878 = vdwg.mxu0
  %v880 = vrot.slane %v877, 7
  %v882 = vadd.f32 %v617, %v880
  %v883 = vtanh.pop %v882
  %v885 = vrot.slane %v883, 1
  %v886 = vsel %vm42, %v885, 0
  %888 = vmatpush.msra.mxu0 0.0
  %889 = vmatpush.msra.mxu0 0.0
  %890 = vmatpush.msra.mxu0 0.0
  %891 = vmatpush.msra.mxu0 0.0
  %892 = vmatpush.msra.mxu0 0.0
  %893 = vmatpush.msra.mxu0 0.0
  %894 = vmatpush.msra.mxu0 0.0
  %895 = vmatpush.msra.mxu0 0.0
  %896 = vmatpush.msra.mxu0 %v634
  %897 = vmatpush.msra.mxu0 %v633
  %898 = vmatpush.msra.mxu0 %v632
  %899 = vmatpush.msra.mxu0 %v631
  %900 = vmatpush.msra.mxu0 %v630
  %901 = vmatpush.msra.mxu0 %v629
  %902 = vmatpush.msra.mxu0 %v628
  %903 = vmatpush.msra.mxu0 %v627
  %904 = vmatmul.f32.gmra.mxu0 %v886
  %v905 = vpop.f32.mrf.mxu0
  %v906 = vadd.f32 %v635, %v905
  %907 = vdwg.mxu0
  %v908 = vtanh.pop %v906
  %v910 = vsel %vm42, %v908, 0
  %912 = vmatpush.msra.mxu0 0.0
  %913 = vmatpush.msra.mxu0 0.0
  %914 = vmatpush.msra.mxu0 0.0
  %915 = vmatpush.msra.mxu0 0.0
  %916 = vmatpush.msra.mxu0 0.0
  %917 = vmatpush.msra.mxu0 0.0
  %918 = vmatpush.msra.mxu0 0.0
  %919 = vmatpush.msra.mxu0 0.0
  %920 = vmatpush.msra.mxu0 %v643
  %921 = vmatpush.msra.mxu0 %v642
  %922 = vmatpush.msra.mxu0 %v641
  %923 = vmatpush.msra.mxu0 %v640
  %924 = vmatpush.msra.mxu0 %v639
  %925 = vmatpush.msra.mxu0 %v638
  %926 = vmatpush.msra.mxu0 %v637
  %927 = vmatpush.msra.mxu0 %v636
  %928 = vmatmul.f32.gmra.mxu0 %v910
  %v929 = vpop.f32.mrf.mxu0
  %v930 = vadd.f32 %v644, %v929
  %931 = vdwg.mxu0
  %932 = vst [vmem:[%s3 + $0xc] sm:$0x1] %v930
  %933 = vmatpush.msra.mxu0 0.0
  %934 = vmatpush.msra.mxu0 0.0
  %935 = vmatpush.msra.mxu0 0.0
  %936 = vmatpush.msra.mxu0 0.0
  %937 = vmatpush.msra.mxu0 0.0
  %938 = vmatpush.msra.mxu0 0.0
  %939 = vmatpush.msra.mxu0 0.0
  %940 = vmatpush.msra.mxu0 0.0
  %941 = vmatpush.msra.mxu0 %v626
  %942 = vmatpush.msra.mxu0 %v625
  %943 = vmatpush.msra.mxu0 %v624
  %944 = vmatpush.msra.mxu0 %v623
  %945 = vmatpush.msra.mxu0 %v622
  %946 = vmatpush.msra.mxu0 %v621
  %947 = vmatpush.msra.mxu0 %v620
  %948 = vmatpush.msra.mxu0 %v619
  %949 = vmatmul.f32.gmra.mxu0 %v886
  %v950 = vpop.f32.mrf.mxu0
  %v951 = vadd.f32 0.0, %v950
  %952 = vdwg.mxu0
  %v953 = vadd.f32 %v617, %v951
  %v954 = vtanh.pop %v953
  %v956 = vsel %vm42, %v954, 0
  %958 = vmatpush.msra.mxu0 0.0
  %959 = vmatpush.msra.mxu0 0.0
  %960 = vmatpush.msra.mxu0 0.0
  %961 = vmatpush.msra.mxu0 0.0
  %962 = vmatpush.msra.mxu0 0.0
  %963 = vmatpush.msra.mxu0 0.0
  %964 = vmatpush.msra.mxu0 0.0
  %965 = vmatpush.msra.mxu0 0.0
  %966 = vmatpush.msra.mxu0 %v634
  %967 = vmatpush.msra.mxu0 %v633
  %968 = vmatpush.msra.mxu0 %v632
  %969 = vmatpush.msra.mxu0 %v631
  %970 = vmatpush.msra.mxu0 %v630
  %971 = vmatpush.msra.mxu0 %v629
  %972 = vmatpush.msra.mxu0 %v628
  %973 = vmatpush.msra.mxu0 %v627
  %974 = vmatmul.f32.gmra.mxu0 %v956
  %v975 = vpop.f32.mrf.mxu0
  %v976 = vadd.f32 %v635, %v975
  %977 = vdwg.mxu0
  %v978 = vtanh.pop %v976
  %v980 = vsel %vm42, %v978, 0
  %982 = vmatpush.msra.mxu0 0.0
  %983 = vmatpush.msra.mxu0 0.0
  %984 = vmatpush.msra.mxu0 0.0
  %985 = vmatpush.msra.mxu0 0.0
  %986 = vmatpush.msra.mxu0 0.0
  %987 = vmatpush.msra.mxu0 0.0
  %988 = vmatpush.msra.mxu0 0.0
  %989 = vmatpush.msra.mxu0 0.0
  %990 = vmatpush.msra.mxu0 %v643
  %991 = vmatpush.msra.mxu0 %v642
  %992 = vmatpush.msra.mxu0 %v641
  %993 = vmatpush.msra.mxu0 %v640
  %994 = vmatpush.msra.mxu0 %v639
  %995 = vmatpush.msra.mxu0 %v638
  %996 = vmatpush.msra.mxu0 %v637
  %997 = vmatpush.msra.mxu0 %v636
  %998 = vmatmul.f32.gmra.mxu0 %v980
  %v999 = vpop.f32.mrf.mxu0
  %v1000 = vadd.f32 %v644, %v999
  %1001 = vdwg.mxu0
  %1002 = vst [vmem:[%s3 + $0xb] sm:$0x1] %v1000
  %1003 = vmatpush.msra.mxu0 0.0
  %1004 = vmatpush.msra.mxu0 0.0
  %1005 = vmatpush.msra.mxu0 0.0
  %1006 = vmatpush.msra.mxu0 0.0
  %1007 = vmatpush.msra.mxu0 0.0
  %1008 = vmatpush.msra.mxu0 0.0
  %1009 = vmatpush.msra.mxu0 0.0
  %1010 = vmatpush.msra.mxu0 0.0
  %1011 = vmatpush.msra.mxu0 %v626
  %1012 = vmatpush.msra.mxu0 %v625
  %1013 = vmatpush.msra.mxu0 %v624
  %1014 = vmatpush.msra.mxu0 %v623
  %1015 = vmatpush.msra.mxu0 %v622
  %1016 = vmatpush.msra.mxu0 %v621
  %1017 = vmatpush.msra.mxu0 %v620
  %1018 = vmatpush.msra.mxu0 %v619
  %1019 = vmatmul.f32.gmra.mxu0 %v956
  %v1020 = vpop.f32.mrf.mxu0
  %v1021 = vadd.f32 0.0, %v1020
  %1022 = vdwg.mxu0
  %v1024 = vrot.slane %v1021, 7
  %v1026 = vadd.f32 %v617, %v1024
  %v1027 = vtanh.pop %v1026
  %v1029 = vrot.slane %v1027, 1
  %v1030 = vsel %vm42, %v1029, 0
  %1032 = vmatpush.msra.mxu0 0.0
  %1033 = vmatpush.msra.mxu0 0.0
  %1034 = vmatpush.msra.mxu0 0.0
  %1035 = vmatpush.msra.mxu0 0.0
  %1036 = vmatpush.msra.mxu0 0.0
  %1037 = vmatpush.msra.mxu0 0.0
  %1038 = vmatpush.msra.mxu0 0.0
  %1039 = vmatpush.msra.mxu0 0.0
  %1040 = vmatpush.msra.mxu0 %v634
  %1041 = vmatpush.msra.mxu0 %v633
  %1042 = vmatpush.msra.mxu0 %v632
  %1043 = vmatpush.msra.mxu0 %v631
  %1044 = vmatpush.msra.mxu0 %v630
  %1045 = vmatpush.msra.mxu0 %v629
  %1046 = vmatpush.msra.mxu0 %v628
  %1047 = vmatpush.msra.mxu0 %v627
  %1048 = vmatmul.f32.gmra.mxu0 %v1030
  %v1049 = vpop.f32.mrf.mxu0
  %v1050 = vadd.f32 %v635, %v1049
  %1051 = vdwg.mxu0
  %v1052 = vtanh.pop %v1050
  %v1054 = vsel %vm42, %v1052, 0
  %1056 = vmatpush.msra.mxu0 0.0
  %1057 = vmatpush.msra.mxu0 0.0
  %1058 = vmatpush.msra.mxu0 0.0
  %1059 = vmatpush.msra.mxu0 0.0
  %1060 = vmatpush.msra.mxu0 0.0
  %1061 = vmatpush.msra.mxu0 0.0
  %1062 = vmatpush.msra.mxu0 0.0
  %1063 = vmatpush.msra.mxu0 0.0
  %1064 = vmatpush.msra.mxu0 %v643
  %1065 = vmatpush.msra.mxu0 %v642
  %1066 = vmatpush.msra.mxu0 %v641
  %1067 = vmatpush.msra.mxu0 %v640
  %1068 = vmatpush.msra.mxu0 %v639
  %1069 = vmatpush.msra.mxu0 %v638
  %1070 = vmatpush.msra.mxu0 %v637
  %1071 = vmatpush.msra.mxu0 %v636
  %1072 = vmatmul.f32.gmra.mxu0 %v1054
  %v1073 = vpop.f32.mrf.mxu0
  %v1074 = vadd.f32 %v644, %v1073
  %1075 = vdwg.mxu0
  %1076 = vst [vmem:[%s3 + $0xa] sm:$0x1] %v1074
  %1077 = vmatpush.msra.mxu0 0.0
  %1078 = vmatpush.msra.mxu0 0.0
  %1079 = vmatpush.msra.mxu0 0.0
  %1080 = vmatpush.msra.mxu0 0.0
  %1081 = vmatpush.msra.mxu0 0.0
  %1082 = vmatpush.msra.mxu0 0.0
  %1083 = vmatpush.msra.mxu0 0.0
  %1084 = vmatpush.msra.mxu0 0.0
  %1085 = vmatpush.msra.mxu0 %v626
  %1086 = vmatpush.msra.mxu0 %v625
  %1087 = vmatpush.msra.mxu0 %v624
  %1088 = vmatpush.msra.mxu0 %v623
  %1089 = vmatpush.msra.mxu0 %v622
  %1090 = vmatpush.msra.mxu0 %v621
  %1091 = vmatpush.msra.mxu0 %v620
  %1092 = vmatpush.msra.mxu0 %v619
  %1093 = vmatmul.f32.gmra.mxu0 %v1030
  %v1094 = vpop.f32.mrf.mxu0
  %v1095 = vadd.f32 0.0, %v1094
  %1096 = vdwg.mxu0
  %v1097 = vadd.f32 %v617, %v1095
  %v1098 = vtanh.pop %v1097
  %v1100 = vsel %vm42, %v1098, 0
  %1102 = vmatpush.msra.mxu0 0.0
  %1103 = vmatpush.msra.mxu0 0.0
  %1104 = vmatpush.msra.mxu0 0.0
  %1105 = vmatpush.msra.mxu0 0.0
  %1106 = vmatpush.msra.mxu0 0.0
  %1107 = vmatpush.msra.mxu0 0.0
  %1108 = vmatpush.msra.mxu0 0.0
  %1109 = vmatpush.msra.mxu0 0.0
  %1110 = vmatpush.msra.mxu0 %v634
  %1111 = vmatpush.msra.mxu0 %v633
  %1112 = vmatpush.msra.mxu0 %v632
  %1113 = vmatpush.msra.mxu0 %v631
  %1114 = vmatpush.msra.mxu0 %v630
  %1115 = vmatpush.msra.mxu0 %v629
  %1116 = vmatpush.msra.mxu0 %v628
  %1117 = vmatpush.msra.mxu0 %v627
  %1118 = vmatmul.f32.gmra.mxu0 %v1100
  %v1119 = vpop.f32.mrf.mxu0
  %v1120 = vadd.f32 %v635, %v1119
  %1121 = vdwg.mxu0
  %v1122 = vtanh.pop %v1120
  %v1124 = vsel %vm42, %v1122, 0
  %1126 = vmatpush.msra.mxu0 0.0
  %1127 = vmatpush.msra.mxu0 0.0
  %1128 = vmatpush.msra.mxu0 0.0
  %1129 = vmatpush.msra.mxu0 0.0
  %1130 = vmatpush.msra.mxu0 0.0
  %1131 = vmatpush.msra.mxu0 0.0
  %1132 = vmatpush.msra.mxu0 0.0
  %1133 = vmatpush.msra.mxu0 0.0
  %1134 = vmatpush.msra.mxu0 %v643
  %1135 = vmatpush.msra.mxu0 %v642
  %1136 = vmatpush.msra.mxu0 %v641
  %1137 = vmatpush.msra.mxu0 %v640
  %1138 = vmatpush.msra.mxu0 %v639
  %1139 = vmatpush.msra.mxu0 %v638
  %1140 = vmatpush.msra.mxu0 %v637
  %1141 = vmatpush.msra.mxu0 %v636
  %1142 = vmatmul.f32.gmra.mxu0 %v1124
  %v1143 = vpop.f32.mrf.mxu0
  %v1144 = vadd.f32 %v644, %v1143
  %1145 = vdwg.mxu0
  %1146 = vst [vmem:[%s3 + $0x9] sm:$0x1] %v1144
  %1147 = vmatpush.msra.mxu0 0.0
  %1148 = vmatpush.msra.mxu0 0.0
  %1149 = vmatpush.msra.mxu0 0.0
  %1150 = vmatpush.msra.mxu0 0.0
  %1151 = vmatpush.msra.mxu0 0.0
  %1152 = vmatpush.msra.mxu0 0.0
  %1153 = vmatpush.msra.mxu0 0.0
  %1154 = vmatpush.msra.mxu0 0.0
  %1155 = vmatpush.msra.mxu0 %v626
  %1156 = vmatpush.msra.mxu0 %v625
  %1157 = vmatpush.msra.mxu0 %v624
  %1158 = vmatpush.msra.mxu0 %v623
  %1159 = vmatpush.msra.mxu0 %v622
  %1160 = vmatpush.msra.mxu0 %v621
  %1161 = vmatpush.msra.mxu0 %v620
  %1162 = vmatpush.msra.mxu0 %v619
  %1163 = vmatmul.f32.gmra.mxu0 %v1100
  %v1164 = vpop.f32.mrf.mxu0
  %v1165 = vadd.f32 0.0, %v1164
  %1166 = vdwg.mxu0
  %v1168 = vrot.slane %v1165, 7
  %v1170 = vadd.f32 %v617, %v1168
  %v1171 = vtanh.pop %v1170
  %v1173 = vrot.slane %v1171, 1
  %v1174 = vsel %vm42, %v1173, 0
  %1176 = vmatpush.msra.mxu0 0.0
  %1177 = vmatpush.msra.mxu0 0.0
  %1178 = vmatpush.msra.mxu0 0.0
  %1179 = vmatpush.msra.mxu0 0.0
  %1180 = vmatpush.msra.mxu0 0.0
  %1181 = vmatpush.msra.mxu0 0.0
  %1182 = vmatpush.msra.mxu0 0.0
  %1183 = vmatpush.msra.mxu0 0.0
  %1184 = vmatpush.msra.mxu0 %v634
  %1185 = vmatpush.msra.mxu0 %v633
  %1186 = vmatpush.msra.mxu0 %v632
  %1187 = vmatpush.msra.mxu0 %v631
  %1188 = vmatpush.msra.mxu0 %v630
  %1189 = vmatpush.msra.mxu0 %v629
  %1190 = vmatpush.msra.mxu0 %v628
  %1191 = vmatpush.msra.mxu0 %v627
  %1192 = vmatmul.f32.gmra.mxu0 %v1174
  %v1193 = vpop.f32.mrf.mxu0
  %v1194 = vadd.f32 %v635, %v1193
  %1195 = vdwg.mxu0
  %v1196 = vtanh.pop %v1194
  %v1198 = vsel %vm42, %v1196, 0
  %1200 = vmatpush.msra.mxu0 0.0
  %1201 = vmatpush.msra.mxu0 0.0
  %1202 = vmatpush.msra.mxu0 0.0
  %1203 = vmatpush.msra.mxu0 0.0
  %1204 = vmatpush.msra.mxu0 0.0
  %1205 = vmatpush.msra.mxu0 0.0
  %1206 = vmatpush.msra.mxu0 0.0
  %1207 = vmatpush.msra.mxu0 0.0
  %1208 = vmatpush.msra.mxu0 %v643
  %1209 = vmatpush.msra.mxu0 %v642
  %1210 = vmatpush.msra.mxu0 %v641
  %1211 = vmatpush.msra.mxu0 %v640
  %1212 = vmatpush.msra.mxu0 %v639
  %1213 = vmatpush.msra.mxu0 %v638
  %1214 = vmatpush.msra.mxu0 %v637
  %1215 = vmatpush.msra.mxu0 %v636
  %1216 = vmatmul.f32.gmra.mxu0 %v1198
  %v1217 = vpop.f32.mrf.mxu0
  %v1218 = vadd.f32 %v644, %v1217
  %1219 = vdwg.mxu0
  %1220 = vst [vmem:[%s3 + $0x8] sm:$0x1] %v1218
  %1221 = vmatpush.msra.mxu0 0.0
  %1222 = vmatpush.msra.mxu0 0.0
  %1223 = vmatpush.msra.mxu0 0.0
  %1224 = vmatpush.msra.mxu0 0.0
  %1225 = vmatpush.msra.mxu0 0.0
  %1226 = vmatpush.msra.mxu0 0.0
  %1227 = vmatpush.msra.mxu0 0.0
  %1228 = vmatpush.msra.mxu0 0.0
  %1229 = vmatpush.msra.mxu0 %v626
  %1230 = vmatpush.msra.mxu0 %v625
  %1231 = vmatpush.msra.mxu0 %v624
  %1232 = vmatpush.msra.mxu0 %v623
  %1233 = vmatpush.msra.mxu0 %v622
  %1234 = vmatpush.msra.mxu0 %v621
  %1235 = vmatpush.msra.mxu0 %v620
  %1236 = vmatpush.msra.mxu0 %v619
  %1237 = vmatmul.f32.gmra.mxu0 %v1174
  %v1238 = vpop.f32.mrf.mxu0
  %v1239 = vadd.f32 0.0, %v1238
  %1240 = vdwg.mxu0
  %v1241 = vadd.f32 %v617, %v1239
  %v1242 = vtanh.pop %v1241
  %v1244 = vsel %vm42, %v1242, 0
  %1246 = vmatpush.msra.mxu0 0.0
  %1247 = vmatpush.msra.mxu0 0.0
  %1248 = vmatpush.msra.mxu0 0.0
  %1249 = vmatpush.msra.mxu0 0.0
  %1250 = vmatpush.msra.mxu0 0.0
  %1251 = vmatpush.msra.mxu0 0.0
  %1252 = vmatpush.msra.mxu0 0.0
  %1253 = vmatpush.msra.mxu0 0.0
  %1254 = vmatpush.msra.mxu0 %v634
  %1255 = vmatpush.msra.mxu0 %v633
  %1256 = vmatpush.msra.mxu0 %v632
  %1257 = vmatpush.msra.mxu0 %v631
  %1258 = vmatpush.msra.mxu0 %v630
  %1259 = vmatpush.msra.mxu0 %v629
  %1260 = vmatpush.msra.mxu0 %v628
  %1261 = vmatpush.msra.mxu0 %v627
  %1262 = vmatmul.f32.gmra.mxu0 %v1244
  %v1263 = vpop.f32.mrf.mxu0
  %v1264 = vadd.f32 %v635, %v1263
  %1265 = vdwg.mxu0
  %v1266 = vtanh.pop %v1264
  %v1268 = vsel %vm42, %v1266, 0
  %1270 = vmatpush.msra.mxu0 0.0
  %1271 = vmatpush.msra.mxu0 0.0
  %1272 = vmatpush.msra.mxu0 0.0
  %1273 = vmatpush.msra.mxu0 0.0
  %1274 = vmatpush.msra.mxu0 0.0
  %1275 = vmatpush.msra.mxu0 0.0
  %1276 = vmatpush.msra.mxu0 0.0
  %1277 = vmatpush.msra.mxu0 0.0
  %1278 = vmatpush.msra.mxu0 %v643
  %1279 = vmatpush.msra.mxu0 %v642
  %1280 = vmatpush.msra.mxu0 %v641
  %1281 = vmatpush.msra.mxu0 %v640
  %1282 = vmatpush.msra.mxu0 %v639
  %1283 = vmatpush.msra.mxu0 %v638
  %1284 = vmatpush.msra.mxu0 %v637
  %1285 = vmatpush.msra.mxu0 %v636
  %1286 = vmatmul.f32.gmra.mxu0 %v1268
  %v1287 = vpop.f32.mrf.mxu0
  %v1288 = vadd.f32 %v644, %v1287
  %1289 = vdwg.mxu0
  %1290 = vst [vmem:[%s3 + $0x7] sm:$0x1] %v1288
  %1291 = vmatpush.msra.mxu0 0.0
  %1292 = vmatpush.msra.mxu0 0.0
  %1293 = vmatpush.msra.mxu0 0.0
  %1294 = vmatpush.msra.mxu0 0.0
  %1295 = vmatpush.msra.mxu0 0.0
  %1296 = vmatpush.msra.mxu0 0.0
  %1297 = vmatpush.msra.mxu0 0.0
  %1298 = vmatpush.msra.mxu0 0.0
  %1299 = vmatpush.msra.mxu0 %v626
  %1300 = vmatpush.msra.mxu0 %v625
  %1301 = vmatpush.msra.mxu0 %v624
  %1302 = vmatpush.msra.mxu0 %v623
  %1303 = vmatpush.msra.mxu0 %v622
  %1304 = vmatpush.msra.mxu0 %v621
  %1305 = vmatpush.msra.mxu0 %v620
  %1306 = vmatpush.msra.mxu0 %v619
  %1307 = vmatmul.f32.gmra.mxu0 %v1244
  %v1308 = vpop.f32.mrf.mxu0
  %v1309 = vadd.f32 0.0, %v1308
  %1310 = vdwg.mxu0
  %v1312 = vrot.slane %v1309, 7
  %v1314 = vadd.f32 %v617, %v1312
  %v1315 = vtanh.pop %v1314
  %v1317 = vrot.slane %v1315, 1
  %v1318 = vsel %vm42, %v1317, 0
  %1320 = vmatpush.msra.mxu0 0.0
  %1321 = vmatpush.msra.mxu0 0.0
  %1322 = vmatpush.msra.mxu0 0.0
  %1323 = vmatpush.msra.mxu0 0.0
  %1324 = vmatpush.msra.mxu0 0.0
  %1325 = vmatpush.msra.mxu0 0.0
  %1326 = vmatpush.msra.mxu0 0.0
  %1327 = vmatpush.msra.mxu0 0.0
  %1328 = vmatpush.msra.mxu0 %v634
  %1329 = vmatpush.msra.mxu0 %v633
  %1330 = vmatpush.msra.mxu0 %v632
  %1331 = vmatpush.msra.mxu0 %v631
  %1332 = vmatpush.msra.mxu0 %v630
  %1333 = vmatpush.msra.mxu0 %v629
  %1334 = vmatpush.msra.mxu0 %v628
  %1335 = vmatpush.msra.mxu0 %v627
  %1336 = vmatmul.f32.gmra.mxu0 %v1318
  %v1337 = vpop.f32.mrf.mxu0
  %v1338 = vadd.f32 %v635, %v1337
  %1339 = vdwg.mxu0
  %v1340 = vtanh.pop %v1338
  %v1342 = vsel %vm42, %v1340, 0
  %1344 = vmatpush.msra.mxu0 0.0
  %1345 = vmatpush.msra.mxu0 0.0
  %1346 = vmatpush.msra.mxu0 0.0
  %1347 = vmatpush.msra.mxu0 0.0
  %1348 = vmatpush.msra.mxu0 0.0
  %1349 = vmatpush.msra.mxu0 0.0
  %1350 = vmatpush.msra.mxu0 0.0
  %1351 = vmatpush.msra.mxu0 0.0
  %1352 = vmatpush.msra.mxu0 %v643
  %1353 = vmatpush.msra.mxu0 %v642
  %1354 = vmatpush.msra.mxu0 %v641
  %1355 = vmatpush.msra.mxu0 %v640
  %1356 = vmatpush.msra.mxu0 %v639
  %1357 = vmatpush.msra.mxu0 %v638
  %1358 = vmatpush.msra.mxu0 %v637
  %1359 = vmatpush.msra.mxu0 %v636
  %1360 = vmatmul.f32.gmra.mxu0 %v1342
  %v1361 = vpop.f32.mrf.mxu0
  %v1362 = vadd.f32 %v644, %v1361
  %1363 = vdwg.mxu0
  %1364 = vst [vmem:[%s3 + $0x6] sm:$0x1] %v1362
  %1365 = vmatpush.msra.mxu0 0.0
  %1366 = vmatpush.msra.mxu0 0.0
  %1367 = vmatpush.msra.mxu0 0.0
  %1368 = vmatpush.msra.mxu0 0.0
  %1369 = vmatpush.msra.mxu0 0.0
  %1370 = vmatpush.msra.mxu0 0.0
  %1371 = vmatpush.msra.mxu0 0.0
  %1372 = vmatpush.msra.mxu0 0.0
  %1373 = vmatpush.msra.mxu0 %v626
  %1374 = vmatpush.msra.mxu0 %v625
  %1375 = vmatpush.msra.mxu0 %v624
  %1376 = vmatpush.msra.mxu0 %v623
  %1377 = vmatpush.msra.mxu0 %v622
  %1378 = vmatpush.msra.mxu0 %v621
  %1379 = vmatpush.msra.mxu0 %v620
  %1380 = vmatpush.msra.mxu0 %v619
  %1381 = vmatmul.f32.gmra.mxu0 %v1318
  %v1382 = vpop.f32.mrf.mxu0
  %v1383 = vadd.f32 0.0, %v1382
  %1384 = vdwg.mxu0
  %v1385 = vadd.f32 %v617, %v1383
  %v1386 = vtanh.pop %v1385
  %v1388 = vsel %vm42, %v1386, 0
  %1390 = vmatpush.msra.mxu0 0.0
  %1391 = vmatpush.msra.mxu0 0.0
  %1392 = vmatpush.msra.mxu0 0.0
  %1393 = vmatpush.msra.mxu0 0.0
  %1394 = vmatpush.msra.mxu0 0.0
  %1395 = vmatpush.msra.mxu0 0.0
  %1396 = vmatpush.msra.mxu0 0.0
  %1397 = vmatpush.msra.mxu0 0.0
  %1398 = vmatpush.msra.mxu0 %v634
  %1399 = vmatpush.msra.mxu0 %v633
  %1400 = vmatpush.msra.mxu0 %v632
  %1401 = vmatpush.msra.mxu0 %v631
  %1402 = vmatpush.msra.mxu0 %v630
  %1403 = vmatpush.msra.mxu0 %v629
  %1404 = vmatpush.msra.mxu0 %v628
  %1405 = vmatpush.msra.mxu0 %v627
  %1406 = vmatmul.f32.gmra.mxu0 %v1388
  %v1407 = vpop.f32.mrf.mxu0
  %v1408 = vadd.f32 %v635, %v1407
  %1409 = vdwg.mxu0
  %v1410 = vtanh.pop %v1408
  %v1412 = vsel %vm42, %v1410, 0
  %1414 = vmatpush.msra.mxu0 0.0
  %1415 = vmatpush.msra.mxu0 0.0
  %1416 = vmatpush.msra.mxu0 0.0
  %1417 = vmatpush.msra.mxu0 0.0
  %1418 = vmatpush.msra.mxu0 0.0
  %1419 = vmatpush.msra.mxu0 0.0
  %1420 = vmatpush.msra.mxu0 0.0
  %1421 = vmatpush.msra.mxu0 0.0
  %1422 = vmatpush.msra.mxu0 %v643
  %1423 = vmatpush.msra.mxu0 %v642
  %1424 = vmatpush.msra.mxu0 %v641
  %1425 = vmatpush.msra.mxu0 %v640
  %1426 = vmatpush.msra.mxu0 %v639
  %1427 = vmatpush.msra.mxu0 %v638
  %1428 = vmatpush.msra.mxu0 %v637
  %1429 = vmatpush.msra.mxu0 %v636
  %1430 = vmatmul.f32.gmra.mxu0 %v1412
  %v1431 = vpop.f32.mrf.mxu0
  %v1432 = vadd.f32 %v644, %v1431
  %1433 = vdwg.mxu0
  %1434 = vst [vmem:[%s3 + $0x5] sm:$0x1] %v1432
  %1435 = vmatpush.msra.mxu0 0.0
  %1436 = vmatpush.msra.mxu0 0.0
  %1437 = vmatpush.msra.mxu0 0.0
  %1438 = vmatpush.msra.mxu0 0.0
  %1439 = vmatpush.msra.mxu0 0.0
  %1440 = vmatpush.msra.mxu0 0.0
  %1441 = vmatpush.msra.mxu0 0.0
  %1442 = vmatpush.msra.mxu0 0.0
  %1443 = vmatpush.msra.mxu0 %v626
  %1444 = vmatpush.msra.mxu0 %v625
  %1445 = vmatpush.msra.mxu0 %v624
  %1446 = vmatpush.msra.mxu0 %v623
  %1447 = vmatpush.msra.mxu0 %v622
  %1448 = vmatpush.msra.mxu0 %v621
  %1449 = vmatpush.msra.mxu0 %v620
  %1450 = vmatpush.msra.mxu0 %v619
  %1451 = vmatmul.f32.gmra.mxu0 %v1388
  %v1452 = vpop.f32.mrf.mxu0
  %v1453 = vadd.f32 0.0, %v1452
  %1454 = vdwg.mxu0
  %v1456 = vrot.slane %v1453, 7
  %v1458 = vadd.f32 %v617, %v1456
  %v1459 = vtanh.pop %v1458
  %v1461 = vrot.slane %v1459, 1
  %v1462 = vsel %vm42, %v1461, 0
  %1464 = vmatpush.msra.mxu0 0.0
  %1465 = vmatpush.msra.mxu0 0.0
  %1466 = vmatpush.msra.mxu0 0.0
  %1467 = vmatpush.msra.mxu0 0.0
  %1468 = vmatpush.msra.mxu0 0.0
  %1469 = vmatpush.msra.mxu0 0.0
  %1470 = vmatpush.msra.mxu0 0.0
  %1471 = vmatpush.msra.mxu0 0.0
  %1472 = vmatpush.msra.mxu0 %v634
  %1473 = vmatpush.msra.mxu0 %v633
  %1474 = vmatpush.msra.mxu0 %v632
  %1475 = vmatpush.msra.mxu0 %v631
  %1476 = vmatpush.msra.mxu0 %v630
  %1477 = vmatpush.msra.mxu0 %v629
  %1478 = vmatpush.msra.mxu0 %v628
  %1479 = vmatpush.msra.mxu0 %v627
  %1480 = vmatmul.f32.gmra.mxu0 %v1462
  %v1481 = vpop.f32.mrf.mxu0
  %v1482 = vadd.f32 %v635, %v1481
  %1483 = vdwg.mxu0
  %v1484 = vtanh.pop %v1482
  %v1486 = vsel %vm42, %v1484, 0
  %1488 = vmatpush.msra.mxu0 0.0
  %1489 = vmatpush.msra.mxu0 0.0
  %1490 = vmatpush.msra.mxu0 0.0
  %1491 = vmatpush.msra.mxu0 0.0
  %1492 = vmatpush.msra.mxu0 0.0
  %1493 = vmatpush.msra.mxu0 0.0
  %1494 = vmatpush.msra.mxu0 0.0
  %1495 = vmatpush.msra.mxu0 0.0
  %1496 = vmatpush.msra.mxu0 %v643
  %1497 = vmatpush.msra.mxu0 %v642
  %1498 = vmatpush.msra.mxu0 %v641
  %1499 = vmatpush.msra.mxu0 %v640
  %1500 = vmatpush.msra.mxu0 %v639
  %1501 = vmatpush.msra.mxu0 %v638
  %1502 = vmatpush.msra.mxu0 %v637
  %1503 = vmatpush.msra.mxu0 %v636
  %1504 = vmatmul.f32.gmra.mxu0 %v1486
  %v1505 = vpop.f32.mrf.mxu0
  %v1506 = vadd.f32 %v644, %v1505
  %1507 = vdwg.mxu0
  %1508 = vst [vmem:[%s3 + $0x4] sm:$0x1] %v1506
  %1509 = vmatpush.msra.mxu0 0.0
  %1510 = vmatpush.msra.mxu0 0.0
  %1511 = vmatpush.msra.mxu0 0.0
  %1512 = vmatpush.msra.mxu0 0.0
  %1513 = vmatpush.msra.mxu0 0.0
  %1514 = vmatpush.msra.mxu0 0.0
  %1515 = vmatpush.msra.mxu0 0.0
  %1516 = vmatpush.msra.mxu0 0.0
  %1517 = vmatpush.msra.mxu0 %v626
  %1518 = vmatpush.msra.mxu0 %v625
  %1519 = vmatpush.msra.mxu0 %v624
  %1520 = vmatpush.msra.mxu0 %v623
  %1521 = vmatpush.msra.mxu0 %v622
  %1522 = vmatpush.msra.mxu0 %v621
  %1523 = vmatpush.msra.mxu0 %v620
  %1524 = vmatpush.msra.mxu0 %v619
  %1525 = vmatmul.f32.gmra.mxu0 %v1462
  %v1526 = vpop.f32.mrf.mxu0
  %v1527 = vadd.f32 0.0, %v1526
  %1528 = vdwg.mxu0
  %v1529 = vadd.f32 %v617, %v1527
  %v1530 = vtanh.pop %v1529
  %v1532 = vsel %vm42, %v1530, 0
  %1534 = vmatpush.msra.mxu0 0.0
  %1535 = vmatpush.msra.mxu0 0.0
  %1536 = vmatpush.msra.mxu0 0.0
  %1537 = vmatpush.msra.mxu0 0.0
  %1538 = vmatpush.msra.mxu0 0.0
  %1539 = vmatpush.msra.mxu0 0.0
  %1540 = vmatpush.msra.mxu0 0.0
  %1541 = vmatpush.msra.mxu0 0.0
  %1542 = vmatpush.msra.mxu0 %v634
  %1543 = vmatpush.msra.mxu0 %v633
  %1544 = vmatpush.msra.mxu0 %v632
  %1545 = vmatpush.msra.mxu0 %v631
  %1546 = vmatpush.msra.mxu0 %v630
  %1547 = vmatpush.msra.mxu0 %v629
  %1548 = vmatpush.msra.mxu0 %v628
  %1549 = vmatpush.msra.mxu0 %v627
  %1550 = vmatmul.f32.gmra.mxu0 %v1532
  %v1551 = vpop.f32.mrf.mxu0
  %v1552 = vadd.f32 %v635, %v1551
  %1553 = vdwg.mxu0
  %v1554 = vtanh.pop %v1552
  %v1556 = vsel %vm42, %v1554, 0
  %1558 = vmatpush.msra.mxu0 0.0
  %1559 = vmatpush.msra.mxu0 0.0
  %1560 = vmatpush.msra.mxu0 0.0
  %1561 = vmatpush.msra.mxu0 0.0
  %1562 = vmatpush.msra.mxu0 0.0
  %1563 = vmatpush.msra.mxu0 0.0
  %1564 = vmatpush.msra.mxu0 0.0
  %1565 = vmatpush.msra.mxu0 0.0
  %1566 = vmatpush.msra.mxu0 %v643
  %1567 = vmatpush.msra.mxu0 %v642
  %1568 = vmatpush.msra.mxu0 %v641
  %1569 = vmatpush.msra.mxu0 %v640
  %1570 = vmatpush.msra.mxu0 %v639
  %1571 = vmatpush.msra.mxu0 %v638
  %1572 = vmatpush.msra.mxu0 %v637
  %1573 = vmatpush.msra.mxu0 %v636
  %1574 = vmatmul.f32.gmra.mxu0 %v1556
  %v1575 = vpop.f32.mrf.mxu0
  %v1576 = vadd.f32 %v644, %v1575
  %1577 = vdwg.mxu0
  %1578 = vst [vmem:[%s3 + $0x3] sm:$0x1] %v1576
  %1579 = vmatpush.msra.mxu0 0.0
  %1580 = vmatpush.msra.mxu0 0.0
  %1581 = vmatpush.msra.mxu0 0.0
  %1582 = vmatpush.msra.mxu0 0.0
  %1583 = vmatpush.msra.mxu0 0.0
  %1584 = vmatpush.msra.mxu0 0.0
  %1585 = vmatpush.msra.mxu0 0.0
  %1586 = vmatpush.msra.mxu0 0.0
  %1587 = vmatpush.msra.mxu0 %v626
  %1588 = vmatpush.msra.mxu0 %v625
  %1589 = vmatpush.msra.mxu0 %v624
  %1590 = vmatpush.msra.mxu0 %v623
  %1591 = vmatpush.msra.mxu0 %v622
  %1592 = vmatpush.msra.mxu0 %v621
  %1593 = vmatpush.msra.mxu0 %v620
  %1594 = vmatpush.msra.mxu0 %v619
  %1595 = vmatmul.f32.gmra.mxu0 %v1532
  %v1596 = vpop.f32.mrf.mxu0
  %v1597 = vadd.f32 0.0, %v1596
  %1598 = vdwg.mxu0
  %v1600 = vrot.slane %v1597, 7
  %v1602 = vadd.f32 %v617, %v1600
  %v1603 = vtanh.pop %v1602
  %v1605 = vrot.slane %v1603, 1
  %v1606 = vsel %vm42, %v1605, 0
  %1608 = vmatpush.msra.mxu0 0.0
  %1609 = vmatpush.msra.mxu0 0.0
  %1610 = vmatpush.msra.mxu0 0.0
  %1611 = vmatpush.msra.mxu0 0.0
  %1612 = vmatpush.msra.mxu0 0.0
  %1613 = vmatpush.msra.mxu0 0.0
  %1614 = vmatpush.msra.mxu0 0.0
  %1615 = vmatpush.msra.mxu0 0.0
  %1616 = vmatpush.msra.mxu0 %v634
  %1617 = vmatpush.msra.mxu0 %v633
  %1618 = vmatpush.msra.mxu0 %v632
  %1619 = vmatpush.msra.mxu0 %v631
  %1620 = vmatpush.msra.mxu0 %v630
  %1621 = vmatpush.msra.mxu0 %v629
  %1622 = vmatpush.msra.mxu0 %v628
  %1623 = vmatpush.msra.mxu0 %v627
  %1624 = vmatmul.f32.gmra.mxu0 %v1606
  %v1625 = vpop.f32.mrf.mxu0
  %v1626 = vadd.f32 %v635, %v1625
  %1627 = vdwg.mxu0
  %v1628 = vtanh.pop %v1626
  %v1630 = vsel %vm42, %v1628, 0
  %1632 = vmatpush.msra.mxu0 0.0
  %1633 = vmatpush.msra.mxu0 0.0
  %1634 = vmatpush.msra.mxu0 0.0
  %1635 = vmatpush.msra.mxu0 0.0
  %1636 = vmatpush.msra.mxu0 0.0
  %1637 = vmatpush.msra.mxu0 0.0
  %1638 = vmatpush.msra.mxu0 0.0
  %1639 = vmatpush.msra.mxu0 0.0
  %1640 = vmatpush.msra.mxu0 %v643
  %1641 = vmatpush.msra.mxu0 %v642
  %1642 = vmatpush.msra.mxu0 %v641
  %1643 = vmatpush.msra.mxu0 %v640
  %1644 = vmatpush.msra.mxu0 %v639
  %1645 = vmatpush.msra.mxu0 %v638
  %1646 = vmatpush.msra.mxu0 %v637
  %1647 = vmatpush.msra.mxu0 %v636
  %1648 = vmatmul.f32.gmra.mxu0 %v1630
  %v1649 = vpop.f32.mrf.mxu0
  %v1650 = vadd.f32 %v644, %v1649
  %1651 = vdwg.mxu0
  %1652 = vst [vmem:[%s3 + $0x2] sm:$0x1] %v1650
  %1653 = vmatpush.msra.mxu0 0.0
  %1654 = vmatpush.msra.mxu0 0.0
  %1655 = vmatpush.msra.mxu0 0.0
  %1656 = vmatpush.msra.mxu0 0.0
  %1657 = vmatpush.msra.mxu0 0.0
  %1658 = vmatpush.msra.mxu0 0.0
  %1659 = vmatpush.msra.mxu0 0.0
  %1660 = vmatpush.msra.mxu0 0.0
  %1661 = vmatpush.msra.mxu0 %v626
  %1662 = vmatpush.msra.mxu0 %v625
  %1663 = vmatpush.msra.mxu0 %v624
  %1664 = vmatpush.msra.mxu0 %v623
  %1665 = vmatpush.msra.mxu0 %v622
  %1666 = vmatpush.msra.mxu0 %v621
  %1667 = vmatpush.msra.mxu0 %v620
  %1668 = vmatpush.msra.mxu0 %v619
  %1669 = vmatmul.f32.gmra.mxu0 %v1606
  %v1670 = vpop.f32.mrf.mxu0
  %v1671 = vadd.f32 0.0, %v1670
  %1672 = vdwg.mxu0
  %v1673 = vadd.f32 %v617, %v1671
  %v1674 = vtanh.pop %v1673
  %v1676 = vsel %vm42, %v1674, 0
  %1678 = vmatpush.msra.mxu0 0.0
  %1679 = vmatpush.msra.mxu0 0.0
  %1680 = vmatpush.msra.mxu0 0.0
  %1681 = vmatpush.msra.mxu0 0.0
  %1682 = vmatpush.msra.mxu0 0.0
  %1683 = vmatpush.msra.mxu0 0.0
  %1684 = vmatpush.msra.mxu0 0.0
  %1685 = vmatpush.msra.mxu0 0.0
  %1686 = vmatpush.msra.mxu0 %v634
  %1687 = vmatpush.msra.mxu0 %v633
  %1688 = vmatpush.msra.mxu0 %v632
  %1689 = vmatpush.msra.mxu0 %v631
  %1690 = vmatpush.msra.mxu0 %v630
  %1691 = vmatpush.msra.mxu0 %v629
  %1692 = vmatpush.msra.mxu0 %v628
  %1693 = vmatpush.msra.mxu0 %v627
  %1694 = vmatmul.f32.gmra.mxu0 %v1676
  %v1695 = vpop.f32.mrf.mxu0
  %v1696 = vadd.f32 %v635, %v1695
  %1697 = vdwg.mxu0
  %v1698 = vtanh.pop %v1696
  %v1700 = vsel %vm42, %v1698, 0
  %1702 = vmatpush.msra.mxu0 0.0
  %1703 = vmatpush.msra.mxu0 0.0
  %1704 = vmatpush.msra.mxu0 0.0
  %1705 = vmatpush.msra.mxu0 0.0
  %1706 = vmatpush.msra.mxu0 0.0
  %1707 = vmatpush.msra.mxu0 0.0
  %1708 = vmatpush.msra.mxu0 0.0
  %1709 = vmatpush.msra.mxu0 0.0
  %1710 = vmatpush.msra.mxu0 %v643
  %1711 = vmatpush.msra.mxu0 %v642
  %1712 = vmatpush.msra.mxu0 %v641
  %1713 = vmatpush.msra.mxu0 %v640
  %1714 = vmatpush.msra.mxu0 %v639
  %1715 = vmatpush.msra.mxu0 %v638
  %1716 = vmatpush.msra.mxu0 %v637
  %1717 = vmatpush.msra.mxu0 %v636
  %1718 = vmatmul.f32.gmra.mxu0 %v1700
  %v1719 = vpop.f32.mrf.mxu0
  %v1720 = vadd.f32 %v644, %v1719
  %1721 = vdwg.mxu0
  %1722 = vst [vmem:[%s3 + $0x1] sm:$0x1] %v1720
  %1723 = vmatpush.msra.mxu0 0.0
  %1724 = vmatpush.msra.mxu0 0.0
  %1725 = vmatpush.msra.mxu0 0.0
  %1726 = vmatpush.msra.mxu0 0.0
  %1727 = vmatpush.msra.mxu0 0.0
  %1728 = vmatpush.msra.mxu0 0.0
  %1729 = vmatpush.msra.mxu0 0.0
  %1730 = vmatpush.msra.mxu0 0.0
  %1731 = vmatpush.msra.mxu0 %v626
  %1732 = vmatpush.msra.mxu0 %v625
  %1733 = vmatpush.msra.mxu0 %v624
  %1734 = vmatpush.msra.mxu0 %v623
  %1735 = vmatpush.msra.mxu0 %v622
  %1736 = vmatpush.msra.mxu0 %v621
  %1737 = vmatpush.msra.mxu0 %v620
  %1738 = vmatpush.msra.mxu0 %v619
  %1739 = vmatmul.f32.gmra.mxu0 %v1676
  %v1740 = vpop.f32.mrf.mxu0
  %v1741 = vadd.f32 0.0, %v1740
  %1742 = vdwg.mxu0
  %v1744 = vrot.slane %v1741, 7
  %v1746 = vadd.f32 %v617, %v1744
  %v1747 = vtanh.pop %v1746
  %v1749 = vrot.slane %v1747, 1
  %v1750 = vsel %vm42, %v1749, 0
  %1752 = vmatpush.msra.mxu0 0.0
  %1753 = vmatpush.msra.mxu0 0.0
  %1754 = vmatpush.msra.mxu0 0.0
  %1755 = vmatpush.msra.mxu0 0.0
  %1756 = vmatpush.msra.mxu0 0.0
  %1757 = vmatpush.msra.mxu0 0.0
  %1758 = vmatpush.msra.mxu0 0.0
  %1759 = vmatpush.msra.mxu0 0.0
  %1760 = vmatpush.msra.mxu0 %v634
  %1761 = vmatpush.msra.mxu0 %v633
  %1762 = vmatpush.msra.mxu0 %v632
  %1763 = vmatpush.msra.mxu0 %v631
  %1764 = vmatpush.msra.mxu0 %v630
  %1765 = vmatpush.msra.mxu0 %v629
  %1766 = vmatpush.msra.mxu0 %v628
  %1767 = vmatpush.msra.mxu0 %v627
  %1768 = vmatmul.f32.gmra.mxu0 %v1750
  %v1769 = vpop.f32.mrf.mxu0
  %v1770 = vadd.f32 %v635, %v1769
  %1771 = vdwg.mxu0
  %v1772 = vtanh.pop %v1770
  %v1774 = vsel %vm42, %v1772, 0
  %1776 = vmatpush.msra.mxu0 0.0
  %1777 = vmatpush.msra.mxu0 0.0
  %1778 = vmatpush.msra.mxu0 0.0
  %1779 = vmatpush.msra.mxu0 0.0
  %1780 = vmatpush.msra.mxu0 0.0
  %1781 = vmatpush.msra.mxu0 0.0
  %1782 = vmatpush.msra.mxu0 0.0
  %1783 = vmatpush.msra.mxu0 0.0
  %1784 = vmatpush.msra.mxu0 %v643
  %1785 = vmatpush.msra.mxu0 %v642
  %1786 = vmatpush.msra.mxu0 %v641
  %1787 = vmatpush.msra.mxu0 %v640
  %1788 = vmatpush.msra.mxu0 %v639
  %1789 = vmatpush.msra.mxu0 %v638
  %1790 = vmatpush.msra.mxu0 %v637
  %1791 = vmatpush.msra.mxu0 %v636
  %1792 = vmatmul.f32.gmra.mxu0 %v1774
  %v1793 = vpop.f32.mrf.mxu0
  %v1794 = vadd.f32 %v644, %v1793
  %1795 = vdwg.mxu0
  %1796 = vst [vmem:[%s3] sm:$0x1] %v1794
  // Predicated region
  $region14: #{forward.1} parent=0 // pred_check
    _
  $region15: #{forward.1} parent=0 // pred_check_branch
    %1798 = sbr.rel (0) target = $region17
  $region16: #{forward.1} parent=0 // pred_region
    _
  $region17: #{forward.1} parent=0 // pred_fallthru
    _
  // Predicated region
  $region18: #{forward.1} parent=0 // pred_check
    _
  $region19: #{forward.1} parent=0 // pred_check_branch
    %1800 = sbr.rel (0) target = $region21
  $region20: #{forward.1} parent=0 // pred_region
    _
  $region21: #{forward.1} parent=0 // pred_fallthru
    _
  // Predicated region
  $region22: #{forward.1} parent=0 // pred_check
    _
  $region23: #{forward.1} parent=0 // pred_check_branch
    %1802 = sbr.rel (0) target = $region25
  $region24: #{forward.1} parent=0 // pred_region
    _
  $region25: #{forward.1} parent=0 // pred_fallthru
    _
  // Predicated region
  $region26: #{forward.1} parent=0 // pred_check
    _
  $region27: #{forward.1} parent=0 // pred_check_branch
    %1804 = sbr.rel (0) target = $region29
  $region28: #{forward.1} parent=0 // pred_region
    _
  $region29: #{forward.1} parent=0 // pred_fallthru
    _

</llo_original>
